<compile_context>
chip_gen: v6e
topology: v6e:2x2x1
jax: 0.10.0
libtpu: 0.0.40
codegen_flags: <defaults>
</compile_context>

<pallas_src>
import functools

import jax
import jax.numpy as jnp
import numpy as np
from jax.experimental import pallas as pl
from jax.experimental.pallas import tpu as pltpu

LANE = 128


def _round_up(x, m):
    return ((x + m - 1) // m) * m


def _pick_tiles(n_pad):
    """Largest 128-aligned tiles dividing n_pad (tk<=1024, tm<=512).

    tm prefers a size that yields >= 2 row tiles so the 'parallel' row axis can
    be sharded across both TensorCores on v7x.
    """
    tk = next(t for t in (1024, 512, 256, 128) if n_pad % t == 0)
    tm = next((t for t in (512, 256, 128) if n_pad % t == 0 and n_pad // t >= 2),
              None)
    if tm is None:
        tm = next(t for t in (512, 256, 128) if n_pad % t == 0)
    return tm, tk


def _sage_kernel(a_ref, xk_ref, xi_ref, scale_ref, wst_ref, b_ref, o_ref,
                 acc_ref, *, apply_relu):
    k = pl.program_id(1)

    @pl.when(k == 0)
    def _():
        acc_ref[...] = jnp.zeros_like(acc_ref)

    # Aggregation partial product on the MXU: acc += counts[i, k] @ x[k].
    # Counts stream as int8 (half the HBM bytes of bf16); the cast to bf16 is
    # on the otherwise-idle VPU (kernel is DMA-bound).  Counts are small
    # integers, exactly representable in bf16.
    acc_ref[...] += jnp.dot(a_ref[...].astype(jnp.bfloat16), xk_ref[...],
                            preferred_element_type=jnp.float32)

    @pl.when(k == pl.num_programs(1) - 1)
    def _():
        # Exact mean: per-row 1/deg scale in f32, applied once in the epilogue.
        agg = (acc_ref[...] * scale_ref[...]).astype(jnp.bfloat16)
        # Fused epilogue GEMM: [agg | x_i] @ [W_l^T ; W_r^T]
        both = jnp.concatenate([agg, xi_ref[...]], axis=1)      # (tm, 2Cp) bf16
        out = jnp.dot(both, wst_ref[...], preferred_element_type=jnp.float32)
        out = out + b_ref[...]            # (1, Cp) broadcast, once per row tile
        if apply_relu:
            out = jnp.maximum(out, 0.0)
        o_ref[...] = out.astype(o_ref.dtype)


def sage_conv(counts, x, inv_deg, w_stack, b, *, apply_relu, out_dtype, tm, tk):
    """One SAGEConv layer on padded inputs.

    counts:  (Np, Np) int8 edge counts (counts[i, j] = #edges j -> i)
    x:       (Np, Cp) bf16 node features
    inv_deg: (Np, 1)  f32 per-row 1/in_degree (0 for isolated / padded rows)
    w_stack: (2*Cp, Cp) bf16 pre-transposed [W_l^T ; W_r^T]
    b:       (1, Cp) f32 bias
    Returns  (Np, Cp) in out_dtype.
    """
    n_pad, c_pad = x.shape
    grid = (n_pad // tm, n_pad // tk)
    kernel = functools.partial(_sage_kernel, apply_relu=apply_relu)
    # TODO(synk): single-buffer the k-invariant W/bias operands
    # (pipeline_mode=pl.Buffered(1)) once Cp grows large enough to matter on
    # v7x's 64 MiB VMEM; negligible at Cp=128.
    return pl.pallas_call(
        kernel,
        out_shape=jax.ShapeDtypeStruct((n_pad, c_pad), out_dtype),
        grid_spec=pltpu.PrefetchScalarGridSpec(
            num_scalar_prefetch=0,
            grid=grid,
            in_specs=[
                pl.BlockSpec((tm, tk), lambda i, k: (i, k)),            # counts
                pl.BlockSpec((tk, c_pad), lambda i, k: (k, 0)),         # x (aggregate)
                pl.BlockSpec((tm, c_pad), lambda i, k: (i, 0)),         # x (root)
                pl.BlockSpec((tm, 1), lambda i, k: (i, 0)),             # 1/deg
                pl.BlockSpec((2 * c_pad, c_pad), lambda i, k: (0, 0)),  # [Wl^T;Wr^T]
                pl.BlockSpec((1, c_pad), lambda i, k: (0, 0)),          # bias
            ],
            out_specs=pl.BlockSpec((tm, c_pad), lambda i, k: (i, 0)),
            scratch_shapes=[pltpu.VMEM((tm, c_pad), jnp.float32)],
        ),
        compiler_params=pltpu.CompilerParams(
            dimension_semantics=("parallel", "arbitrary"),
            vmem_limit_bytes=48 * 1024 * 1024,   # safe under v7x's 64 MiB VMEM
        ),
    )(counts, x, x, inv_deg, w_stack, b)


def build_counts_and_scale(edge_index, num_nodes, n_pad):
    """int8 edge counts at padded size + exact f32 per-row 1/deg scale.

    Padded rows/columns are zero, so padded feature rows are never aggregated
    and padded output rows reduce to (relu of) the bias, which is sliced off.
    """
    src = edge_index[0]
    dst = edge_index[1]
    counts = jnp.zeros((n_pad, n_pad), jnp.int32)
    counts = counts.at[dst, src].add(1)
    deg = counts.sum(axis=1, keepdims=True).astype(jnp.float32)
    inv_deg = jnp.where(deg > 0.0, 1.0 / jnp.maximum(deg, 1.0), 0.0)
    # TODO(synk): int8 overflows if any (i, j) pair has >127 parallel edges;
    # clamp or widen for pathological multigraphs.
    return counts.astype(jnp.int8), inv_deg


def gnn_forward(x, edge_index, params):
    n, c = x.shape
    n_pad = _round_up(n, LANE)          # tight padding: A traffic ~ n_pad^2
    tm, tk = _pick_tiles(n_pad)
    c_pad = _round_up(c, LANE)

    # Glue (plain JAX): int8 counts + 1/deg scale (built once, at padded size),
    # zero padding + bf16 casts.
    # TODO(synk): replace dense counts@x with a scalar-prefetched CSR gather /
    # segment-sum kernel for realistically sparse large graphs (E << N^2).
    counts, inv_deg = build_counts_and_scale(edge_index, n, n_pad)
    xp = jnp.pad(x, ((0, n_pad - n), (0, c_pad - c))).astype(jnp.bfloat16)

    def prep_w_stack(w_l, w_r):  # -> (2*Cp, Cp) bf16 [W_l^T ; W_r^T]
        wlt = jnp.pad(w_l.T, ((0, c_pad - c), (0, c_pad - c)))
        wrt = jnp.pad(w_r.T, ((0, c_pad - c), (0, c_pad - c)))
        return jnp.concatenate([wlt, wrt], axis=0).astype(jnp.bfloat16)

    def prep_b(b):  # -> (1, Cp) f32
        return jnp.pad(b.reshape(1, -1), ((0, 0), (0, c_pad - c))).astype(jnp.float32)

    ws1, b1 = prep_w_stack(params["w_l1"], params["w_r1"]), prep_b(params["b1"])
    ws2, b2 = prep_w_stack(params["w_l2"], params["w_r2"]), prep_b(params["b2"])

    # TODO(synk): fuse the two layers into one pallas_call to stream the
    # adjacency only once per row tile (layer-2 aggregation needs all of h).
    h = sage_conv(counts, xp, inv_deg, ws1, b1, apply_relu=True,
                  out_dtype=jnp.bfloat16, tm=tm, tk=tk)
    out = sage_conv(counts, h, inv_deg, ws2, b2, apply_relu=False,
                    out_dtype=jnp.float32, tm=tm, tk=tk)
    return out[:n, :c]


def gnn_reference(x, edge_index, params):
    """Pure-JAX f32 reference (PyG SAGEConv semantics) for validation."""
    n = x.shape[0]
    src, dst = edge_index[0], edge_index[1]
    a = jnp.zeros((n, n), jnp.float32).at[dst, src].add(1.0)
    deg = a.sum(axis=1, keepdims=True)
    a = a / jnp.maximum(deg, 1.0)

    def layer(xx, wl, wr, b):
        return (a @ xx) @ wl.T + xx @ wr.T + b.reshape(1, -1)

    h = jnp.maximum(layer(x, params["w_l1"], params["w_r1"], params["b1"]), 0.0)
    return layer(h, params["w_l2"], params["w_r2"], params["b2"])


def init_params(key, hidden_channels):
    ks = jax.random.split(key, 4)
    scale = 0.1
    c = hidden_channels
    return {
        "w_l1": scale * jax.random.normal(ks[0], (c, c), jnp.float32),
        "w_r1": scale * jax.random.normal(ks[1], (c, c), jnp.float32),
        "b1": jnp.zeros((c,), jnp.float32),
        "w_l2": scale * jax.random.normal(ks[2], (c, c), jnp.float32),
        "w_r2": scale * jax.random.normal(ks[3], (c, c), jnp.float32),
        "b2": jnp.zeros((c,), jnp.float32),
    }


if __name__ == "__main__":
    key = jax.random.PRNGKey(0)
    k_x, k_e, k_p = jax.random.split(key, 3)

    hidden_channels = 32
    num_nodes = 16
    num_edges = 40

    x = jax.random.normal(k_x, (num_nodes, hidden_channels), jnp.float32)
    edge_index = jax.random.randint(k_e, (2, num_edges), 0, num_nodes, jnp.int32)
    params = init_params(k_p, hidden_channels)

    out = jax.jit(gnn_forward)(x, edge_index, params)
    jax.block_until_ready(out)
    assert out.shape == (num_nodes, hidden_channels)

    ref = gnn_reference(x, edge_index, params)
    np.testing.assert_allclose(np.asarray(out), np.asarray(ref),
                               rtol=5e-2, atol=5e-2)  # bf16 matmul drift
    print("KERNEL_OK")
</pallas_src>

<mosaic_0001>
module attributes {stable_mosaic.version = 11 : i64} {
  func.func private @main(%arg0: i32) attributes {dimension_semantics = [#tpu.dimension_semantics<core_parallel>], iteration_bounds = array<i64: 2>, tpu.core_type = #tpu.core_type<sc_scalar_subcore>, window_params = []} {
    return
  }
}

module attributes {stable_mosaic.version = 11 : i64} {
  func.func private @main(%arg0: i32) attributes {dimension_semantics = [#tpu.dimension_semantics<core_parallel>], iteration_bounds = array<i64: 2>, tpu.core_type = #tpu.core_type<sc_scalar_subcore>, window_params = []} {
    return
  }
}

module attributes {stable_mosaic.version = 11 : i64} {
  func.func @_sage_kernel(%arg0: i32, %arg1: i32, %arg2: memref<128x128xi8, #tpu.memory_space<vmem>>, %arg3: memref<128x128xbf16, #tpu.memory_space<vmem>>, %arg4: memref<128x128xbf16, #tpu.memory_space<vmem>>, %arg5: memref<128x1xf32, #tpu.memory_space<vmem>>, %arg6: memref<256x128xbf16, #tpu.memory_space<vmem>>, %arg7: memref<1x128xf32, #tpu.memory_space<vmem>>, %arg8: memref<128x128xbf16, #tpu.memory_space<vmem>>, %arg9: memref<128x128xf32, #tpu.memory_space<vmem>>) attributes {dimension_semantics = [#tpu.dimension_semantics<parallel>, #tpu.dimension_semantics<arbitrary>], iteration_bounds = array<i64: 1, 1>, scalar_prefetch = 0 : i64, scratch_operands = 1 : i64, tpu.core_type = #tpu.core_type<tc>, window_params = [{transform_indices = @transform_0, window_bounds = array<i64: 128, 128>}, {transform_indices = @transform_1, window_bounds = array<i64: 128, 128>}, {transform_indices = @transform_2, window_bounds = array<i64: 128, 128>}, {transform_indices = @transform_3, window_bounds = array<i64: 128, 1>}, {pipeline_mode = #tpu.pipeline_mode<synchronous>, transform_indices = @transform_4, window_bounds = array<i64: 256, 128>}, {pipeline_mode = #tpu.pipeline_mode<synchronous>, transform_indices = @transform_5, window_bounds = array<i64: 1, 128>}, {transform_indices = @transform_6, window_bounds = array<i64: 128, 128>}]} {
    %c0_i32 = arith.constant 0 : i32
    %0 = arith.cmpi eq, %arg1, %c0_i32 : i32
    %1 = arith.extui %0 : i1 to i32
    %c0_i32_0 = arith.constant 0 : i32
    %2 = arith.cmpi ne, %1, %c0_i32_0 : i32
    scf.if %2 {
      %cst_10 = arith.constant 0.000000e+00 : f32
      %13 = vector.broadcast %cst_10 : f32 to vector<128x128xf32>
      %c0_11 = arith.constant 0 : index
      %c0_12 = arith.constant 0 : index
      %14 = vector.load %arg9[%c0_11, %c0_12] : memref<128x128xf32, #tpu.memory_space<vmem>>, vector<128x128xf32>
      tpu.vector_store %arg9[%c0_11, %c0_12], %13 {strides = array<i32>} : memref<128x128xf32, #tpu.memory_space<vmem>>, vector<128x128xf32>,
    } else {
    }
    %c0 = arith.constant 0 : index
    %c0_1 = arith.constant 0 : index
    %3 = vector.load %arg9[%c0, %c0_1] : memref<128x128xf32, #tpu.memory_space<vmem>>, vector<128x128xf32>
    %c0_2 = arith.constant 0 : index
    %c0_3 = arith.constant 0 : index
    %4 = vector.load %arg2[%c0_2, %c0_3] : memref<128x128xi8, #tpu.memory_space<vmem>>, vector<128x128xi8>
    %5 = arith.sitofp %4 : vector<128x128xi8> to vector<128x128xbf16>
    %c0_4 = arith.constant 0 : index
    %c0_5 = arith.constant 0 : index
    %6 = vector.load %arg3[%c0_4, %c0_5] : memref<128x128xbf16, #tpu.memory_space<vmem>>, vector<128x128xbf16>
    %cst = arith.constant dense<0.000000e+00> : vector<128x128xf32>
    %7 = tpu.matmul %5, %6, %cst {dimension_numbers = #tpu.dot_dimension_numbers<[1], [0], [0], [1], [0, 0, 1, 1], [], []>} : vector<128x128xbf16>, vector<128x128xbf16>, vector<128x128xf32> -> vector<128x128xf32>
    %8 = arith.addf %3, %7 : vector<128x128xf32>
    %c0_6 = arith.constant 0 : index
    %c0_7 = arith.constant 0 : index
    %9 = vector.load %arg9[%c0_6, %c0_7] : memref<128x128xf32, #tpu.memory_space<vmem>>, vector<128x128xf32>
    tpu.vector_store %arg9[%c0_6, %c0_7], %8 {strides = array<i32>} : memref<128x128xf32, #tpu.memory_space<vmem>>, vector<128x128xf32>,
    %c0_i32_8 = arith.constant 0 : i32
    %10 = arith.cmpi eq, %arg1, %c0_i32_8 : i32
    %11 = arith.extui %10 : i1 to i32
    %c0_i32_9 = arith.constant 0 : i32
    %12 = arith.cmpi ne, %11, %c0_i32_9 : i32
    scf.if %12 {
      %c0_10 = arith.constant 0 : index
      %c0_11 = arith.constant 0 : index
      %13 = vector.load %arg9[%c0_10, %c0_11] : memref<128x128xf32, #tpu.memory_space<vmem>>, vector<128x128xf32>
      %c0_12 = arith.constant 0 : index
      %c0_13 = arith.constant 0 : index
      %14 = vector.load %arg5[%c0_12, %c0_13] : memref<128x1xf32, #tpu.memory_space<vmem>>, vector<128x1xf32>
      %15 = vector.broadcast %14 : vector<128x1xf32> to vector<128x128xf32>
      %16 = arith.mulf %13, %15 : vector<128x128xf32>
      %17 = arith.truncf %16 : vector<128x128xf32> to vector<128x128xbf16>
      %c0_14 = arith.constant 0 : index
      %c0_15 = arith.constant 0 : index
      %18 = vector.load %arg4[%c0_14, %c0_15] : memref<128x128xbf16, #tpu.memory_space<vmem>>, vector<128x128xbf16>
      %19 = tpu.concatenate %17, %18 in 1 : vector<128x128xbf16>, vector<128x128xbf16> -> vector<128x256xbf16>
      %c0_16 = arith.constant 0 : index
      %c0_17 = arith.constant 0 : index
      %20 = vector.load %arg6[%c0_16, %c0_17] : memref<256x128xbf16, #tpu.memory_space<vmem>>, vector<256x128xbf16>
      %cst_18 = arith.constant dense<0.000000e+00> : vector<128x128xf32>
      %21 = tpu.matmul %19, %20, %cst_18 {dimension_numbers = #tpu.dot_dimension_numbers<[1], [0], [0], [1], [0, 0, 1, 1], [], []>} : vector<128x256xbf16>, vector<256x128xbf16>, vector<128x128xf32> -> vector<128x128xf32>
      %c0_19 = arith.constant 0 : index
      %c0_20 = arith.constant 0 : index
      %22 = vector.load %arg7[%c0_19, %c0_20] : memref<1x128xf32, #tpu.memory_space<vmem>>, vector<1x128xf32>
      %23 = vector.broadcast %22 : vector<1x128xf32> to vector<128x128xf32>
      %24 = arith.addf %21, %23 : vector<128x128xf32>
      %cst_21 = arith.constant 0.000000e+00 : f32
      %25 = vector.broadcast %cst_21 : f32 to vector<128x128xf32>
      %26 = arith.maximumf %24, %25 : vector<128x128xf32>
      %27 = arith.truncf %26 : vector<128x128xf32> to vector<128x128xbf16>
      %c0_22 = arith.constant 0 : index
      %c0_23 = arith.constant 0 : index
      %28 = vector.load %arg8[%c0_22, %c0_23] : memref<128x128xbf16, #tpu.memory_space<vmem>>, vector<128x128xbf16>
      tpu.vector_store %arg8[%c0_22, %c0_23], %27 {strides = array<i32>} : memref<128x128xbf16, #tpu.memory_space<vmem>>, vector<128x128xbf16>,
    } else {
    }
    return
  }
  func.func @transform_0(%arg0: i32, %arg1: i32) -> (i32, i32) {
    %c0_i32 = arith.constant 0 : i32
    return %arg0, %arg1 : i32, i32
  }
  func.func @transform_1(%arg0: i32, %arg1: i32) -> (i32, i32) {
    %c0_i32 = arith.constant 0 : i32
    %c0_i32_0 = arith.constant 0 : i32
    return %arg1, %c0_i32 : i32, i32
  }
  func.func @transform_2(%arg0: i32, %arg1: i32) -> (i32, i32) {
    %c0_i32 = arith.constant 0 : i32
    %c0_i32_0 = arith.constant 0 : i32
    return %arg0, %c0_i32 : i32, i32
  }
  func.func @transform_3(%arg0: i32, %arg1: i32) -> (i32, i32) {
    %c0_i32 = arith.constant 0 : i32
    %c0_i32_0 = arith.constant 0 : i32
    return %arg0, %c0_i32 : i32, i32
  }
  func.func @transform_4(%arg0: i32, %arg1: i32) -> (i32, i32) {
    %c0_i32 = arith.constant 0 : i32
    %c0_i32_0 = arith.constant 0 : i32
    %c0_i32_1 = arith.constant 0 : i32
    return %c0_i32, %c0_i32_0 : i32, i32
  }
  func.func @transform_5(%arg0: i32, %arg1: i32) -> (i32, i32) {
    %c0_i32 = arith.constant 0 : i32
    %c0_i32_0 = arith.constant 0 : i32
    %c0_i32_1 = arith.constant 0 : i32
    return %c0_i32, %c0_i32_0 : i32, i32
  }
  func.func @transform_6(%arg0: i32, %arg1: i32) -> (i32, i32) {
    %c0_i32 = arith.constant 0 : i32
    %c0_i32_0 = arith.constant 0 : i32
    return %arg0, %c0_i32 : i32, i32
  }
}

module attributes {stable_mosaic.version = 11 : i64} {
  func.func @_sage_kernel(%arg0: i32, %arg1: i32, %arg2: memref<128x128xi8, #tpu.memory_space<vmem>>, %arg3: memref<128x128xbf16, #tpu.memory_space<vmem>>, %arg4: memref<128x128xbf16, #tpu.memory_space<vmem>>, %arg5: memref<128x1xf32, #tpu.memory_space<vmem>>, %arg6: memref<256x128xbf16, #tpu.memory_space<vmem>>, %arg7: memref<1x128xf32, #tpu.memory_space<vmem>>, %arg8: memref<128x128xf32, #tpu.memory_space<vmem>>, %arg9: memref<128x128xf32, #tpu.memory_space<vmem>>) attributes {dimension_semantics = [#tpu.dimension_semantics<parallel>, #tpu.dimension_semantics<arbitrary>], iteration_bounds = array<i64: 1, 1>, scalar_prefetch = 0 : i64, scratch_operands = 1 : i64, tpu.core_type = #tpu.core_type<tc>, window_params = [{transform_indices = @transform_0, window_bounds = array<i64: 128, 128>}, {transform_indices = @transform_1, window_bounds = array<i64: 128, 128>}, {transform_indices = @transform_2, window_bounds = array<i64: 128, 128>}, {transform_indices = @transform_3, window_bounds = array<i64: 128, 1>}, {pipeline_mode = #tpu.pipeline_mode<synchronous>, transform_indices = @transform_4, window_bounds = array<i64: 256, 128>}, {pipeline_mode = #tpu.pipeline_mode<synchronous>, transform_indices = @transform_5, window_bounds = array<i64: 1, 128>}, {transform_indices = @transform_6, window_bounds = array<i64: 128, 128>}]} {
    %c0_i32 = arith.constant 0 : i32
    %0 = arith.cmpi eq, %arg1, %c0_i32 : i32
    %1 = arith.extui %0 : i1 to i32
    %c0_i32_0 = arith.constant 0 : i32
    %2 = arith.cmpi ne, %1, %c0_i32_0 : i32
    scf.if %2 {
      %cst_10 = arith.constant 0.000000e+00 : f32
      %13 = vector.broadcast %cst_10 : f32 to vector<128x128xf32>
      %c0_11 = arith.constant 0 : index
      %c0_12 = arith.constant 0 : index
      %14 = vector.load %arg9[%c0_11, %c0_12] : memref<128x128xf32, #tpu.memory_space<vmem>>, vector<128x128xf32>
      tpu.vector_store %arg9[%c0_11, %c0_12], %13 {strides = array<i32>} : memref<128x128xf32, #tpu.memory_space<vmem>>, vector<128x128xf32>,
    } else {
    }
    %c0 = arith.constant 0 : index
    %c0_1 = arith.constant 0 : index
    %3 = vector.load %arg9[%c0, %c0_1] : memref<128x128xf32, #tpu.memory_space<vmem>>, vector<128x128xf32>
    %c0_2 = arith.constant 0 : index
    %c0_3 = arith.constant 0 : index
    %4 = vector.load %arg2[%c0_2, %c0_3] : memref<128x128xi8, #tpu.memory_space<vmem>>, vector<128x128xi8>
    %5 = arith.sitofp %4 : vector<128x128xi8> to vector<128x128xbf16>
    %c0_4 = arith.constant 0 : index
    %c0_5 = arith.constant 0 : index
    %6 = vector.load %arg3[%c0_4, %c0_5] : memref<128x128xbf16, #tpu.memory_space<vmem>>, vector<128x128xbf16>
    %cst = arith.constant dense<0.000000e+00> : vector<128x128xf32>
    %7 = tpu.matmul %5, %6, %cst {dimension_numbers = #tpu.dot_dimension_numbers<[1], [0], [0], [1], [0, 0, 1, 1], [], []>} : vector<128x128xbf16>, vector<128x128xbf16>, vector<128x128xf32> -> vector<128x128xf32>
    %8 = arith.addf %3, %7 : vector<128x128xf32>
    %c0_6 = arith.constant 0 : index
    %c0_7 = arith.constant 0 : index
    %9 = vector.load %arg9[%c0_6, %c0_7] : memref<128x128xf32, #tpu.memory_space<vmem>>, vector<128x128xf32>
    tpu.vector_store %arg9[%c0_6, %c0_7], %8 {strides = array<i32>} : memref<128x128xf32, #tpu.memory_space<vmem>>, vector<128x128xf32>,
    %c0_i32_8 = arith.constant 0 : i32
    %10 = arith.cmpi eq, %arg1, %c0_i32_8 : i32
    %11 = arith.extui %10 : i1 to i32
    %c0_i32_9 = arith.constant 0 : i32
    %12 = arith.cmpi ne, %11, %c0_i32_9 : i32
    scf.if %12 {
      %c0_10 = arith.constant 0 : index
      %c0_11 = arith.constant 0 : index
      %13 = vector.load %arg9[%c0_10, %c0_11] : memref<128x128xf32, #tpu.memory_space<vmem>>, vector<128x128xf32>
      %c0_12 = arith.constant 0 : index
      %c0_13 = arith.constant 0 : index
      %14 = vector.load %arg5[%c0_12, %c0_13] : memref<128x1xf32, #tpu.memory_space<vmem>>, vector<128x1xf32>
      %15 = vector.broadcast %14 : vector<128x1xf32> to vector<128x128xf32>
      %16 = arith.mulf %13, %15 : vector<128x128xf32>
      %17 = arith.truncf %16 : vector<128x128xf32> to vector<128x128xbf16>
      %c0_14 = arith.constant 0 : index
      %c0_15 = arith.constant 0 : index
      %18 = vector.load %arg4[%c0_14, %c0_15] : memref<128x128xbf16, #tpu.memory_space<vmem>>, vector<128x128xbf16>
      %19 = tpu.concatenate %17, %18 in 1 : vector<128x128xbf16>, vector<128x128xbf16> -> vector<128x256xbf16>
      %c0_16 = arith.constant 0 : index
      %c0_17 = arith.constant 0 : index
      %20 = vector.load %arg6[%c0_16, %c0_17] : memref<256x128xbf16, #tpu.memory_space<vmem>>, vector<256x128xbf16>
      %cst_18 = arith.constant dense<0.000000e+00> : vector<128x128xf32>
      %21 = tpu.matmul %19, %20, %cst_18 {dimension_numbers = #tpu.dot_dimension_numbers<[1], [0], [0], [1], [0, 0, 1, 1], [], []>} : vector<128x256xbf16>, vector<256x128xbf16>, vector<128x128xf32> -> vector<128x128xf32>
      %c0_19 = arith.constant 0 : index
      %c0_20 = arith.constant 0 : index
      %22 = vector.load %arg7[%c0_19, %c0_20] : memref<1x128xf32, #tpu.memory_space<vmem>>, vector<1x128xf32>
      %23 = vector.broadcast %22 : vector<1x128xf32> to vector<128x128xf32>
      %24 = arith.addf %21, %23 : vector<128x128xf32>
      %c0_21 = arith.constant 0 : index
      %c0_22 = arith.constant 0 : index
      %25 = vector.load %arg8[%c0_21, %c0_22] : memref<128x128xf32, #tpu.memory_space<vmem>>, vector<128x128xf32>
      tpu.vector_store %arg8[%c0_21, %c0_22], %24 {strides = array<i32>} : memref<128x128xf32, #tpu.memory_space<vmem>>, vector<128x128xf32>,
    } else {
    }
    return
  }
  func.func @transform_0(%arg0: i32, %arg1: i32) -> (i32, i32) {
    %c0_i32 = arith.constant 0 : i32
    return %arg0, %arg1 : i32, i32
  }
  func.func @transform_1(%arg0: i32, %arg1: i32) -> (i32, i32) {
    %c0_i32 = arith.constant 0 : i32
    %c0_i32_0 = arith.constant 0 : i32
    return %arg1, %c0_i32 : i32, i32
  }
  func.func @transform_2(%arg0: i32, %arg1: i32) -> (i32, i32) {
    %c0_i32 = arith.constant 0 : i32
    %c0_i32_0 = arith.constant 0 : i32
    return %arg0, %c0_i32 : i32, i32
  }
  func.func @transform_3(%arg0: i32, %arg1: i32) -> (i32, i32) {
    %c0_i32 = arith.constant 0 : i32
    %c0_i32_0 = arith.constant 0 : i32
    return %arg0, %c0_i32 : i32, i32
  }
  func.func @transform_4(%arg0: i32, %arg1: i32) -> (i32, i32) {
    %c0_i32 = arith.constant 0 : i32
    %c0_i32_0 = arith.constant 0 : i32
    %c0_i32_1 = arith.constant 0 : i32
    return %c0_i32, %c0_i32_0 : i32, i32
  }
  func.func @transform_5(%arg0: i32, %arg1: i32) -> (i32, i32) {
    %c0_i32 = arith.constant 0 : i32
    %c0_i32_0 = arith.constant 0 : i32
    %c0_i32_1 = arith.constant 0 : i32
    return %c0_i32, %c0_i32_0 : i32, i32
  }
  func.func @transform_6(%arg0: i32, %arg1: i32) -> (i32, i32) {
    %c0_i32 = arith.constant 0 : i32
    %c0_i32_0 = arith.constant 0 : i32
    return %arg0, %c0_i32 : i32, i32
  }
}

</mosaic_0001>

<llo_original>
// kernel: gnn_forward.3
$region0: #{gnn_forward.3}
  #allocation0 [shape = 'u32[]', space=smem, size = 0x4, offset = 0x4, fixed_abs, tag = 'smem constant byte address 0x4 - core index']
  #allocation1 [shape = 'u32[144,128]{1,0:T(1,128)}', space=vmem, size = 0x12000, scoped, tag = 'internal scratch']
  #allocation2 [shape = 'f32[128,128]{1,0:T(8,128)}', space=vmem, size = 0x10000, scoped, tag = 'scratch operand']
  %s0 = inlined_call_operand.vmem [shape: s8[128,128], index: 0, kind: input, shape index: {}]
  %s1 = inlined_call_operand.vmem [shape: bf16[128,128], index: 1, kind: input, shape index: {}, may-alias: {1,2}]
  %s2 = inlined_call_operand.vmem [shape: bf16[128,128], index: 2, kind: input, shape index: {}, may-alias: {1,2}]
  %s3 = inlined_call_operand.vmem [shape: f32[128,1], index: 3, kind: input, shape index: {}]
  %s4 = inlined_call_operand.vmem [shape: bf16[256,128], index: 4, kind: input, shape index: {}]
  %s5 = inlined_call_operand.vmem [shape: f32[1,128], index: 5, kind: input, shape index: {}]
  %s6 = inlined_call_operand.vmem [shape: f32[128,128], index: 6, kind: output, shape index: {}]
  %s7 = sld [smem:[#allocation0]]
  $region42: #{gnn_forward.3} parent=0
    _
  %s9 = ssub.s32 1, %s7
  %s10 = scalar_select 0, %s9, %s7
  // Predicated region
  $region2: #{gnn_forward.3} parent=0 // pred_check
    _
  $region3: #{gnn_forward.3} parent=0 // pred_check_branch
    %12 = sbr.rel (0) target = $region5
  $region4: #{gnn_forward.3} parent=0 // pred_region
    _
  $region5: #{gnn_forward.3} parent=0 // pred_fallthru
    _
  // Predicated region
  $region6: #{gnn_forward.3} parent=0 // pred_check
    _
  $region7: #{gnn_forward.3} parent=0 // pred_check_branch
    %14 = sbr.rel (0) target = $region9
  $region8: #{gnn_forward.3} parent=0 // pred_region
    _
  $region9: #{gnn_forward.3} parent=0 // pred_fallthru
    _
  // Predicated region
  $region10: #{gnn_forward.3} parent=0 // pred_check
    _
  $region11: #{gnn_forward.3} parent=0 // pred_check_branch
    %16 = sbr.rel (0) target = $region13
  $region12: #{gnn_forward.3} parent=0 // pred_region
    _
  $region13: #{gnn_forward.3} parent=0 // pred_fallthru
    _
  // Predicated region
  $region14: #{gnn_forward.3} parent=0 // pred_check
    _
  $region15: #{gnn_forward.3} parent=0 // pred_check_branch
    %18 = sbr.rel (0) target = $region17
  $region16: #{gnn_forward.3} parent=0 // pred_region
    _
  $region17: #{gnn_forward.3} parent=0 // pred_fallthru
    _
  // Predicated region
  $region18: #{gnn_forward.3} parent=0 // pred_check
    _
  $region19: #{gnn_forward.3} parent=0 // pred_check_branch
    %20 = sbr.rel (0) target = $region21
  $region20: #{gnn_forward.3} parent=0 // pred_region
    _
  $region21: #{gnn_forward.3} parent=0 // pred_fallthru
    _
  // Predicated region
  $region22: #{gnn_forward.3} parent=0 // pred_check
    _
  $region23: #{gnn_forward.3} parent=0 // pred_check_branch
    %22 = sbr.rel (0) target = $region25
  $region24: #{gnn_forward.3} parent=0 // pred_region
    _
  $region25: #{gnn_forward.3} parent=0 // pred_fallthru
    _
  %p24 = scmp.eq.s32.totalorder 0, 0
  // Predicated region
  $region26: #{gnn_forward.3} parent=0 // pred_check
    %p25 = pneg %p24
  $region27: #{gnn_forward.3} parent=0 // pred_check_branch
    %27 = sbr.rel (%p25) target = $region29
  $region28: #{gnn_forward.3} parent=0 // pred_region
    %28 = vst [vmem:[#allocation2] sm:$0xff] 0.0
    %29 = vst [vmem:[#allocation2 + $0x8] sm:$0xff] 0.0
    %30 = vst [vmem:[#allocation2 + $0x10] sm:$0xff] 0.0
    %31 = vst [vmem:[#allocation2 + $0x18] sm:$0xff] 0.0
    %32 = vst [vmem:[#allocation2 + $0x20] sm:$0xff] 0.0
    %33 = vst [vmem:[#allocation2 + $0x28] sm:$0xff] 0.0
    %34 = vst [vmem:[#allocation2 + $0x30] sm:$0xff] 0.0
    %35 = vst [vmem:[#allocation2 + $0x38] sm:$0xff] 0.0
    %36 = vst [vmem:[#allocation2 + $0x40] sm:$0xff] 0.0
    %37 = vst [vmem:[#allocation2 + $0x48] sm:$0xff] 0.0
    %38 = vst [vmem:[#allocation2 + $0x50] sm:$0xff] 0.0
    %39 = vst [vmem:[#allocation2 + $0x58] sm:$0xff] 0.0
    %40 = vst [vmem:[#allocation2 + $0x60] sm:$0xff] 0.0
    %41 = vst [vmem:[#allocation2 + $0x68] sm:$0xff] 0.0
    %42 = vst [vmem:[#allocation2 + $0x70] sm:$0xff] 0.0
    %43 = vst [vmem:[#allocation2 + $0x78] sm:$0xff] 0.0
  $region29: #{gnn_forward.3} parent=0 // pred_fallthru
    _
  %v44 = vld [vmem:[#allocation2] sm:$0xff]
  %v45 = vld [vmem:[#allocation2 + $0x8] sm:$0xff]
  %v46 = vld [vmem:[#allocation2 + $0x10] sm:$0xff]
  %v47 = vld [vmem:[#allocation2 + $0x18] sm:$0xff]
  %v48 = vld [vmem:[#allocation2 + $0x20] sm:$0xff]
  %v49 = vld [vmem:[#allocation2 + $0x28] sm:$0xff]
  %v50 = vld [vmem:[#allocation2 + $0x30] sm:$0xff]
  %v51 = vld [vmem:[#allocation2 + $0x38] sm:$0xff]
  %v52 = vld [vmem:[#allocation2 + $0x40] sm:$0xff]
  %v53 = vld [vmem:[#allocation2 + $0x48] sm:$0xff]
  %v54 = vld [vmem:[#allocation2 + $0x50] sm:$0xff]
  %v55 = vld [vmem:[#allocation2 + $0x58] sm:$0xff]
  %v56 = vld [vmem:[#allocation2 + $0x60] sm:$0xff]
  %v57 = vld [vmem:[#allocation2 + $0x68] sm:$0xff]
  %v58 = vld [vmem:[#allocation2 + $0x70] sm:$0xff]
  %v59 = vld [vmem:[#allocation2 + $0x78] sm:$0xff]
  %v60 = vld [vmem:[%s0] sm:$0xff]
  %v61 = vld [vmem:[%s0 + $0x8] sm:$0xff]
  %v62 = vld [vmem:[%s0 + $0x10] sm:$0xff]
  %v63 = vld [vmem:[%s0 + $0x18] sm:$0xff]
  %v64 = vunpack.c.l.s8.bf16 %v60
  %v65 = vunpack.c.h.s8.bf16 %v60
  %v66 = vunpack.c.l.s8.bf16 %v61
  %v67 = vunpack.c.h.s8.bf16 %v61
  %v68 = vunpack.c.l.s8.bf16 %v62
  %v69 = vunpack.c.h.s8.bf16 %v62
  %v70 = vunpack.c.l.s8.bf16 %v63
  %v71 = vunpack.c.h.s8.bf16 %v63
  %v72 = vld [vmem:[%s1] sm:$0xf]
  %v73 = vld [vmem:[%s1 + $0x4] sm:$0xf]
  %v74 = vld [vmem:[%s1 + $0x8] sm:$0xf]
  %v75 = vld [vmem:[%s1 + $0xc] sm:$0xf]
  %v76 = vld [vmem:[%s1 + $0x10] sm:$0xf]
  %v77 = vld [vmem:[%s1 + $0x14] sm:$0xf]
  %v78 = vld [vmem:[%s1 + $0x18] sm:$0xf]
  %v79 = vld [vmem:[%s1 + $0x1c] sm:$0xf]
  %v80 = vld [vmem:[%s1 + $0x20] sm:$0xf]
  %v81 = vld [vmem:[%s1 + $0x24] sm:$0xf]
  %v82 = vld [vmem:[%s1 + $0x28] sm:$0xf]
  %v83 = vld [vmem:[%s1 + $0x2c] sm:$0xf]
  %v84 = vld [vmem:[%s1 + $0x30] sm:$0xf]
  %v85 = vld [vmem:[%s1 + $0x34] sm:$0xf]
  %v86 = vld [vmem:[%s1 + $0x38] sm:$0xf]
  %v87 = vld [vmem:[%s1 + $0x3c] sm:$0xf]
  %v104 = vunpack.c.l.b16 %v72
  %v105 = vunpack.c.l.b16 %v73
  %v106 = vunpack.c.l.b16 %v74
  %v107 = vunpack.c.l.b16 %v75
  %v108 = vunpack.c.l.b16 %v76
  %v109 = vunpack.c.l.b16 %v77
  %v110 = vunpack.c.l.b16 %v78
  %v111 = vunpack.c.l.b16 %v79
  %v112 = vunpack.c.l.b16 %v80
  %v113 = vunpack.c.l.b16 %v81
  %v114 = vunpack.c.l.b16 %v82
  %v115 = vunpack.c.l.b16 %v83
  %v116 = vunpack.c.l.b16 %v84
  %v117 = vunpack.c.l.b16 %v85
  %v118 = vunpack.c.l.b16 %v86
  %v119 = vunpack.c.l.b16 %v87
  %v120 = vpack.c.b16 %v105, %v104
  %v121 = vpack.c.b16 %v107, %v106
  %v122 = vpack.c.b16 %v109, %v108
  %v123 = vpack.c.b16 %v111, %v110
  %v124 = vpack.c.b16 %v113, %v112
  %v125 = vpack.c.b16 %v115, %v114
  %v126 = vpack.c.b16 %v117, %v116
  %v127 = vpack.c.b16 %v119, %v118
  %136 = vmatprep.subr.bf16.mxu0 0
  %137 = vmatpush1.bf16.msra.mxu0 %v127
  %138 = vmatprep.subr.bf16.mxu0 0
  %139 = vmatpush1.bf16.msra.mxu0 %v126
  %140 = vmatprep.subr.bf16.mxu0 0
  %141 = vmatpush1.bf16.msra.mxu0 %v125
  %142 = vmatprep.subr.bf16.mxu0 0
  %143 = vmatpush1.bf16.msra.mxu0 %v124
  %144 = vmatprep.subr.bf16.mxu0 0
  %145 = vmatpush1.bf16.msra.mxu0 %v123
  %146 = vmatprep.subr.bf16.mxu0 0
  %147 = vmatpush1.bf16.msra.mxu0 %v122
  %148 = vmatprep.subr.bf16.mxu0 0
  %149 = vmatpush1.bf16.msra.mxu0 %v121
  %150 = vmatprep.subr.bf16.mxu0 0
  %151 = vmatpush1.bf16.msra.mxu0 %v120
  %152 = vmatprep.subr.bf16.mxu0 0
  %153 = vmatpush2.bf16.msra.mxu0 0
  %154 = vmatprep.subr.bf16.mxu0 0
  %155 = vmatpush2.bf16.msra.mxu0 0
  %156 = vmatprep.subr.bf16.mxu0 0
  %157 = vmatpush2.bf16.msra.mxu0 0
  %158 = vmatprep.subr.bf16.mxu0 0
  %159 = vmatpush2.bf16.msra.mxu0 0
  %160 = vmatprep.subr.bf16.mxu0 0
  %161 = vmatpush2.bf16.msra.mxu0 0
  %162 = vmatprep.subr.bf16.mxu0 0
  %163 = vmatpush2.bf16.msra.mxu0 0
  %164 = vmatprep.subr.bf16.mxu0 0
  %165 = vmatpush2.bf16.msra.mxu0 0
  %166 = vmatprep.subr.bf16.mxu0 0
  %167 = vmatpush2.bf16.msra.mxu0 0
  %168 = vmatprep.mubr.bf16.mxu0 0
  %169 = vmatmul.mubr.bf16.gmra.mxu0 %v64
  %v170 = vpop.f32.mrf.mxu0
  %v171 = vadd.f32 0.0, %v170
  %v172 = vpop.f32.mrf.mxu0
  %v173 = vpop.f32.mrf.mxu0
  %v174 = vadd.f32 0.0, %v173
  %v175 = vpop.f32.mrf.mxu0
  %176 = vmatprep.mubr.bf16.mxu0 0
  %177 = vmatmul.mubr.bf16.gmra.mxu0 %v65
  %v178 = vpop.f32.mrf.mxu0
  %v179 = vadd.f32 0.0, %v178
  %v180 = vpop.f32.mrf.mxu0
  %v181 = vpop.f32.mrf.mxu0
  %v182 = vadd.f32 0.0, %v181
  %v183 = vpop.f32.mrf.mxu0
  %184 = vmatprep.mubr.bf16.mxu0 0
  %185 = vmatmul.mubr.bf16.gmra.mxu0 %v66
  %v186 = vpop.f32.mrf.mxu0
  %v187 = vadd.f32 0.0, %v186
  %v188 = vpop.f32.mrf.mxu0
  %v189 = vpop.f32.mrf.mxu0
  %v190 = vadd.f32 0.0, %v189
  %v191 = vpop.f32.mrf.mxu0
  %192 = vmatprep.mubr.bf16.mxu0 0
  %193 = vmatmul.mubr.bf16.gmra.mxu0 %v67
  %v194 = vpop.f32.mrf.mxu0
  %v195 = vadd.f32 0.0, %v194
  %v196 = vpop.f32.mrf.mxu0
  %v197 = vpop.f32.mrf.mxu0
  %v198 = vadd.f32 0.0, %v197
  %v199 = vpop.f32.mrf.mxu0
  %200 = vmatprep.mubr.bf16.mxu0 0
  %201 = vmatmul.mubr.bf16.gmra.mxu0 %v68
  %v202 = vpop.f32.mrf.mxu0
  %v203 = vadd.f32 0.0, %v202
  %v204 = vpop.f32.mrf.mxu0
  %v205 = vpop.f32.mrf.mxu0
  %v206 = vadd.f32 0.0, %v205
  %v207 = vpop.f32.mrf.mxu0
  %208 = vmatprep.mubr.bf16.mxu0 0
  %209 = vmatmul.mubr.bf16.gmra.mxu0 %v69
  %v210 = vpop.f32.mrf.mxu0
  %v211 = vadd.f32 0.0, %v210
  %v212 = vpop.f32.mrf.mxu0
  %v213 = vpop.f32.mrf.mxu0
  %v214 = vadd.f32 0.0, %v213
  %v215 = vpop.f32.mrf.mxu0
  %216 = vmatprep.mubr.bf16.mxu0 0
  %217 = vmatmul.mubr.bf16.gmra.mxu0 %v70
  %v218 = vpop.f32.mrf.mxu0
  %v219 = vadd.f32 0.0, %v218
  %v220 = vpop.f32.mrf.mxu0
  %v221 = vpop.f32.mrf.mxu0
  %v222 = vadd.f32 0.0, %v221
  %v223 = vpop.f32.mrf.mxu0
  %224 = vmatprep.mubr.bf16.mxu0 0
  %225 = vmatmul.mubr.bf16.gmra.mxu0 %v71
  %v226 = vpop.f32.mrf.mxu0
  %v227 = vadd.f32 0.0, %v226
  %v228 = vpop.f32.mrf.mxu0
  %v229 = vpop.f32.mrf.mxu0
  %v230 = vadd.f32 0.0, %v229
  %v231 = vpop.f32.mrf.mxu0
  %232 = vdwg.mxu0
  %v233 = vadd.f32 %v44, %v171
  %v234 = vadd.f32 %v45, %v174
  %v235 = vadd.f32 %v46, %v179
  %v236 = vadd.f32 %v47, %v182
  %v237 = vadd.f32 %v48, %v187
  %v238 = vadd.f32 %v49, %v190
  %v239 = vadd.f32 %v50, %v195
  %v240 = vadd.f32 %v51, %v198
  %v241 = vadd.f32 %v52, %v203
  %v242 = vadd.f32 %v53, %v206
  %v243 = vadd.f32 %v54, %v211
  %v244 = vadd.f32 %v55, %v214
  %v245 = vadd.f32 %v56, %v219
  %v246 = vadd.f32 %v57, %v222
  %v247 = vadd.f32 %v58, %v227
  %v248 = vadd.f32 %v59, %v230
  %249 = vst [vmem:[#allocation2] sm:$0xff] %v233
  %250 = vst [vmem:[#allocation2 + $0x8] sm:$0xff] %v234
  %251 = vst [vmem:[#allocation2 + $0x10] sm:$0xff] %v235
  %252 = vst [vmem:[#allocation2 + $0x18] sm:$0xff] %v236
  %253 = vst [vmem:[#allocation2 + $0x20] sm:$0xff] %v237
  %254 = vst [vmem:[#allocation2 + $0x28] sm:$0xff] %v238
  %255 = vst [vmem:[#allocation2 + $0x30] sm:$0xff] %v239
  %256 = vst [vmem:[#allocation2 + $0x38] sm:$0xff] %v240
  %257 = vst [vmem:[#allocation2 + $0x40] sm:$0xff] %v241
  %258 = vst [vmem:[#allocation2 + $0x48] sm:$0xff] %v242
  %259 = vst [vmem:[#allocation2 + $0x50] sm:$0xff] %v243
  %260 = vst [vmem:[#allocation2 + $0x58] sm:$0xff] %v244
  %261 = vst [vmem:[#allocation2 + $0x60] sm:$0xff] %v245
  %262 = vst [vmem:[#allocation2 + $0x68] sm:$0xff] %v246
  %263 = vst [vmem:[#allocation2 + $0x70] sm:$0xff] %v247
  %264 = vst [vmem:[#allocation2 + $0x78] sm:$0xff] %v248
  // Predicated region
  $region30: #{gnn_forward.3} parent=0 // pred_check
    %p265 = pneg %p24
  $region31: #{gnn_forward.3} parent=0 // pred_check_branch
    %267 = sbr.rel (%p265) target = $region33
  $region32: #{gnn_forward.3} parent=0 // pred_region
    %v268 = vld [vmem:[#allocation2] sm:$0xff]
    %v269 = vld [vmem:[#allocation2 + $0x8] sm:$0xff]
    %v270 = vld [vmem:[#allocation2 + $0x10] sm:$0xff]
    %v271 = vld [vmem:[#allocation2 + $0x18] sm:$0xff]
    %v272 = vld [vmem:[#allocation2 + $0x20] sm:$0xff]
    %v273 = vld [vmem:[#allocation2 + $0x28] sm:$0xff]
    %v274 = vld [vmem:[#allocation2 + $0x30] sm:$0xff]
    %v275 = vld [vmem:[#allocation2 + $0x38] sm:$0xff]
    %v276 = vld [vmem:[#allocation2 + $0x40] sm:$0xff]
    %v277 = vld [vmem:[#allocation2 + $0x48] sm:$0xff]
    %v278 = vld [vmem:[#allocation2 + $0x50] sm:$0xff]
    %v279 = vld [vmem:[#allocation2 + $0x58] sm:$0xff]
    %v280 = vld [vmem:[#allocation2 + $0x60] sm:$0xff]
    %v281 = vld [vmem:[#allocation2 + $0x68] sm:$0xff]
    %v282 = vld [vmem:[#allocation2 + $0x70] sm:$0xff]
    %v283 = vld [vmem:[#allocation2 + $0x78] sm:$0xff]
    %v284 = vld [vmem:[%s3] sm:$0xff]
    %v285 = vld [vmem:[%s3 + $0x8] sm:$0xff]
    %v286 = vld [vmem:[%s3 + $0x10] sm:$0xff]
    %v287 = vld [vmem:[%s3 + $0x18] sm:$0xff]
    %v288 = vld [vmem:[%s3 + $0x20] sm:$0xff]
    %v289 = vld [vmem:[%s3 + $0x28] sm:$0xff]
    %v290 = vld [vmem:[%s3 + $0x30] sm:$0xff]
    %v291 = vld [vmem:[%s3 + $0x38] sm:$0xff]
    %v292 = vld [vmem:[%s3 + $0x40] sm:$0xff]
    %v293 = vld [vmem:[%s3 + $0x48] sm:$0xff]
    %v294 = vld [vmem:[%s3 + $0x50] sm:$0xff]
    %v295 = vld [vmem:[%s3 + $0x58] sm:$0xff]
    %v296 = vld [vmem:[%s3 + $0x60] sm:$0xff]
    %v297 = vld [vmem:[%s3 + $0x68] sm:$0xff]
    %v298 = vld [vmem:[%s3 + $0x70] sm:$0xff]
    %v299 = vld [vmem:[%s3 + $0x78] sm:$0xff]
    %301 = vset.pattern.permute.xlu0 0
    %302 = vperm.xlu0 %301, %v284
    %v303 = vpop.permute.xlu0 %302
    %306 = vset.pattern.permute.xlu0 0
    %307 = vperm.xlu0 %306, %v285
    %v308 = vpop.permute.xlu0 %307
    %311 = vset.pattern.permute.xlu0 0
    %312 = vperm.xlu0 %311, %v286
    %v313 = vpop.permute.xlu0 %312
    %316 = vset.pattern.permute.xlu0 0
    %317 = vperm.xlu0 %316, %v287
    %v318 = vpop.permute.xlu0 %317
    %321 = vset.pattern.permute.xlu0 0
    %322 = vperm.xlu0 %321, %v288
    %v323 = vpop.permute.xlu0 %322
    %326 = vset.pattern.permute.xlu0 0
    %327 = vperm.xlu0 %326, %v289
    %v328 = vpop.permute.xlu0 %327
    %331 = vset.pattern.permute.xlu0 0
    %332 = vperm.xlu0 %331, %v290
    %v333 = vpop.permute.xlu0 %332
    %336 = vset.pattern.permute.xlu0 0
    %337 = vperm.xlu0 %336, %v291
    %v338 = vpop.permute.xlu0 %337
    %341 = vset.pattern.permute.xlu0 0
    %342 = vperm.xlu0 %341, %v292
    %v343 = vpop.permute.xlu0 %342
    %346 = vset.pattern.permute.xlu0 0
    %347 = vperm.xlu0 %346, %v293
    %v348 = vpop.permute.xlu0 %347
    %351 = vset.pattern.permute.xlu0 0
    %352 = vperm.xlu0 %351, %v294
    %v353 = vpop.permute.xlu0 %352
    %356 = vset.pattern.permute.xlu0 0
    %357 = vperm.xlu0 %356, %v295
    %v358 = vpop.permute.xlu0 %357
    %361 = vset.pattern.permute.xlu0 0
    %362 = vperm.xlu0 %361, %v296
    %v363 = vpop.permute.xlu0 %362
    %366 = vset.pattern.permute.xlu0 0
    %367 = vperm.xlu0 %366, %v297
    %v368 = vpop.permute.xlu0 %367
    %371 = vset.pattern.permute.xlu0 0
    %372 = vperm.xlu0 %371, %v298
    %v373 = vpop.permute.xlu0 %372
    %376 = vset.pattern.permute.xlu0 0
    %377 = vperm.xlu0 %376, %v299
    %v378 = vpop.permute.xlu0 %377
    %v380 = vmul.f32 %v268, %v303
    %v381 = vmul.f32 %v269, %v308
    %v382 = vmul.f32 %v270, %v313
    %v383 = vmul.f32 %v271, %v318
    %v384 = vmul.f32 %v272, %v323
    %v385 = vmul.f32 %v273, %v328
    %v386 = vmul.f32 %v274, %v333
    %v387 = vmul.f32 %v275, %v338
    %v388 = vmul.f32 %v276, %v343
    %v389 = vmul.f32 %v277, %v348
    %v390 = vmul.f32 %v278, %v353
    %v391 = vmul.f32 %v279, %v358
    %v392 = vmul.f32 %v280, %v363
    %v393 = vmul.f32 %v281, %v368
    %v394 = vmul.f32 %v282, %v373
    %v395 = vmul.f32 %v283, %v378
    %v396 = vpack.c.bf16 %v381, %v380
    %v397 = vpack.c.bf16 %v383, %v382
    %v398 = vpack.c.bf16 %v385, %v384
    %v399 = vpack.c.bf16 %v387, %v386
    %v400 = vpack.c.bf16 %v389, %v388
    %v401 = vpack.c.bf16 %v391, %v390
    %v402 = vpack.c.bf16 %v393, %v392
    %v403 = vpack.c.bf16 %v395, %v394
    %v404 = vld [vmem:[%s2] sm:$0xf]
    %v405 = vld [vmem:[%s2 + $0x4] sm:$0xf]
    %v406 = vld [vmem:[%s2 + $0x8] sm:$0xf]
    %v407 = vld [vmem:[%s2 + $0xc] sm:$0xf]
    %v408 = vld [vmem:[%s2 + $0x10] sm:$0xf]
    %v409 = vld [vmem:[%s2 + $0x14] sm:$0xf]
    %v410 = vld [vmem:[%s2 + $0x18] sm:$0xf]
    %v411 = vld [vmem:[%s2 + $0x1c] sm:$0xf]
    %v412 = vld [vmem:[%s2 + $0x20] sm:$0xf]
    %v413 = vld [vmem:[%s2 + $0x24] sm:$0xf]
    %v414 = vld [vmem:[%s2 + $0x28] sm:$0xf]
    %v415 = vld [vmem:[%s2 + $0x2c] sm:$0xf]
    %v416 = vld [vmem:[%s2 + $0x30] sm:$0xf]
    %v417 = vld [vmem:[%s2 + $0x34] sm:$0xf]
    %v418 = vld [vmem:[%s2 + $0x38] sm:$0xf]
    %v419 = vld [vmem:[%s2 + $0x3c] sm:$0xf]
    %v436 = vunpack.c.l.b16 %v404
    %v437 = vunpack.c.l.b16 %v405
    %v438 = vunpack.c.l.b16 %v406
    %v439 = vunpack.c.l.b16 %v407
    %v440 = vunpack.c.l.b16 %v408
    %v441 = vunpack.c.l.b16 %v409
    %v442 = vunpack.c.l.b16 %v410
    %v443 = vunpack.c.l.b16 %v411
    %v444 = vunpack.c.l.b16 %v412
    %v445 = vunpack.c.l.b16 %v413
    %v446 = vunpack.c.l.b16 %v414
    %v447 = vunpack.c.l.b16 %v415
    %v448 = vunpack.c.l.b16 %v416
    %v449 = vunpack.c.l.b16 %v417
    %v450 = vunpack.c.l.b16 %v418
    %v451 = vunpack.c.l.b16 %v419
    %v452 = vpack.c.b16 %v437, %v436
    %v453 = vpack.c.b16 %v439, %v438
    %v454 = vpack.c.b16 %v441, %v440
    %v455 = vpack.c.b16 %v443, %v442
    %v456 = vpack.c.b16 %v445, %v444
    %v457 = vpack.c.b16 %v447, %v446
    %v458 = vpack.c.b16 %v449, %v448
    %v459 = vpack.c.b16 %v451, %v450
    %v468 = vld [vmem:[%s4] sm:$0xf]
    %v469 = vld [vmem:[%s4 + $0x4] sm:$0xf]
    %v470 = vld [vmem:[%s4 + $0x8] sm:$0xf]
    %v471 = vld [vmem:[%s4 + $0xc] sm:$0xf]
    %v472 = vld [vmem:[%s4 + $0x10] sm:$0xf]
    %v473 = vld [vmem:[%s4 + $0x14] sm:$0xf]
    %v474 = vld [vmem:[%s4 + $0x18] sm:$0xf]
    %v475 = vld [vmem:[%s4 + $0x1c] sm:$0xf]
    %v476 = vld [vmem:[%s4 + $0x20] sm:$0xf]
    %v477 = vld [vmem:[%s4 + $0x24] sm:$0xf]
    %v478 = vld [vmem:[%s4 + $0x28] sm:$0xf]
    %v479 = vld [vmem:[%s4 + $0x2c] sm:$0xf]
    %v480 = vld [vmem:[%s4 + $0x30] sm:$0xf]
    %v481 = vld [vmem:[%s4 + $0x34] sm:$0xf]
    %v482 = vld [vmem:[%s4 + $0x38] sm:$0xf]
    %v483 = vld [vmem:[%s4 + $0x3c] sm:$0xf]
    %v484 = vld [vmem:[%s4 + $0x40] sm:$0xf]
    %v485 = vld [vmem:[%s4 + $0x44] sm:$0xf]
    %v486 = vld [vmem:[%s4 + $0x48] sm:$0xf]
    %v487 = vld [vmem:[%s4 + $0x4c] sm:$0xf]
    %v488 = vld [vmem:[%s4 + $0x50] sm:$0xf]
    %v489 = vld [vmem:[%s4 + $0x54] sm:$0xf]
    %v490 = vld [vmem:[%s4 + $0x58] sm:$0xf]
    %v491 = vld [vmem:[%s4 + $0x5c] sm:$0xf]
    %v492 = vld [vmem:[%s4 + $0x60] sm:$0xf]
    %v493 = vld [vmem:[%s4 + $0x64] sm:$0xf]
    %v494 = vld [vmem:[%s4 + $0x68] sm:$0xf]
    %v495 = vld [vmem:[%s4 + $0x6c] sm:$0xf]
    %v496 = vld [vmem:[%s4 + $0x70] sm:$0xf]
    %v497 = vld [vmem:[%s4 + $0x74] sm:$0xf]
    %v498 = vld [vmem:[%s4 + $0x78] sm:$0xf]
    %v499 = vld [vmem:[%s4 + $0x7c] sm:$0xf]
    %v500 = vld [vmem:[%s5] sm:$0x1]
    %v502 = vlaneseq
    %v503 = vshrl.u32 %v502, 7
    %v504 = vsub.s32 0, %v503
    %v505 = vrot.slane %v500, %v504
    %v539 = vunpack.c.l.b16 %v468
    %v540 = vunpack.c.l.b16 %v469
    %v541 = vunpack.c.l.b16 %v470
    %v542 = vunpack.c.l.b16 %v471
    %v543 = vunpack.c.l.b16 %v472
    %v544 = vunpack.c.l.b16 %v473
    %v545 = vunpack.c.l.b16 %v474
    %v546 = vunpack.c.l.b16 %v475
    %v547 = vunpack.c.l.b16 %v476
    %v548 = vunpack.c.l.b16 %v477
    %v549 = vunpack.c.l.b16 %v478
    %v550 = vunpack.c.l.b16 %v479
    %v551 = vunpack.c.l.b16 %v480
    %v552 = vunpack.c.l.b16 %v481
    %v553 = vunpack.c.l.b16 %v482
    %v554 = vunpack.c.l.b16 %v483
    %v555 = vunpack.c.l.b16 %v484
    %v556 = vunpack.c.l.b16 %v485
    %v557 = vunpack.c.l.b16 %v486
    %v558 = vunpack.c.l.b16 %v487
    %v559 = vunpack.c.l.b16 %v488
    %v560 = vunpack.c.l.b16 %v489
    %v561 = vunpack.c.l.b16 %v490
    %v562 = vunpack.c.l.b16 %v491
    %v563 = vunpack.c.l.b16 %v492
    %v564 = vunpack.c.l.b16 %v493
    %v565 = vunpack.c.l.b16 %v494
    %v566 = vunpack.c.l.b16 %v495
    %v567 = vunpack.c.l.b16 %v496
    %v568 = vunpack.c.l.b16 %v497
    %v569 = vunpack.c.l.b16 %v498
    %v570 = vunpack.c.l.b16 %v499
    %v571 = vpack.c.b16 %v540, %v539
    %v572 = vpack.c.b16 %v542, %v541
    %v573 = vpack.c.b16 %v544, %v543
    %v574 = vpack.c.b16 %v546, %v545
    %v575 = vpack.c.b16 %v548, %v547
    %v576 = vpack.c.b16 %v550, %v549
    %v577 = vpack.c.b16 %v552, %v551
    %v578 = vpack.c.b16 %v554, %v553
    %v579 = vpack.c.b16 %v556, %v555
    %v580 = vpack.c.b16 %v558, %v557
    %v581 = vpack.c.b16 %v560, %v559
    %v582 = vpack.c.b16 %v562, %v561
    %v583 = vpack.c.b16 %v564, %v563
    %v584 = vpack.c.b16 %v566, %v565
    %v585 = vpack.c.b16 %v568, %v567
    %v586 = vpack.c.b16 %v570, %v569
    %603 = vmatprep.subr.bf16.mxu0 0
    %604 = vmatpush1.bf16.msra.mxu0 %v578
    %605 = vmatprep.subr.bf16.mxu0 0
    %606 = vmatpush1.bf16.msra.mxu0 %v577
    %607 = vmatprep.subr.bf16.mxu0 0
    %608 = vmatpush1.bf16.msra.mxu0 %v576
    %609 = vmatprep.subr.bf16.mxu0 0
    %610 = vmatpush1.bf16.msra.mxu0 %v575
    %611 = vmatprep.subr.bf16.mxu0 0
    %612 = vmatpush1.bf16.msra.mxu0 %v574
    %613 = vmatprep.subr.bf16.mxu0 0
    %614 = vmatpush1.bf16.msra.mxu0 %v573
    %615 = vmatprep.subr.bf16.mxu0 0
    %616 = vmatpush1.bf16.msra.mxu0 %v572
    %617 = vmatprep.subr.bf16.mxu0 0
    %618 = vmatpush1.bf16.msra.mxu0 %v571
    %619 = vmatprep.subr.bf16.mxu0 0
    %620 = vmatpush2.bf16.msra.mxu0 %v586
    %621 = vmatprep.subr.bf16.mxu0 0
    %622 = vmatpush2.bf16.msra.mxu0 %v585
    %623 = vmatprep.subr.bf16.mxu0 0
    %624 = vmatpush2.bf16.msra.mxu0 %v584
    %625 = vmatprep.subr.bf16.mxu0 0
    %626 = vmatpush2.bf16.msra.mxu0 %v583
    %627 = vmatprep.subr.bf16.mxu0 0
    %628 = vmatpush2.bf16.msra.mxu0 %v582
    %629 = vmatprep.subr.bf16.mxu0 0
    %630 = vmatpush2.bf16.msra.mxu0 %v581
    %631 = vmatprep.subr.bf16.mxu0 0
    %632 = vmatpush2.bf16.msra.mxu0 %v580
    %633 = vmatprep.subr.bf16.mxu0 0
    %634 = vmatpush2.bf16.msra.mxu0 %v579
    %635 = vmatprep.mubr.bf16.mxu0 %v452
    %636 = vmatmul.mubr.bf16.gmra.mxu0 %v396
    %v637 = vpop.f32.mrf.mxu0
    %v638 = vadd.f32 %v505, %v637
    %v639 = vpop.f32.mrf.mxu0
    %v640 = vpop.f32.mrf.mxu0
    %v641 = vadd.f32 %v505, %v640
    %v642 = vpop.f32.mrf.mxu0
    %643 = vmatprep.mubr.bf16.mxu0 %v453
    %644 = vmatmul.mubr.bf16.gmra.mxu0 %v397
    %v645 = vpop.f32.mrf.mxu0
    %v646 = vadd.f32 %v505, %v645
    %v647 = vpop.f32.mrf.mxu0
    %v648 = vpop.f32.mrf.mxu0
    %v649 = vadd.f32 %v505, %v648
    %v650 = vpop.f32.mrf.mxu0
    %651 = vmatprep.mubr.bf16.mxu0 %v454
    %652 = vmatmul.mubr.bf16.gmra.mxu0 %v398
    %v653 = vpop.f32.mrf.mxu0
    %v654 = vadd.f32 %v505, %v653
    %v655 = vpop.f32.mrf.mxu0
    %v656 = vpop.f32.mrf.mxu0
    %v657 = vadd.f32 %v505, %v656
    %v658 = vpop.f32.mrf.mxu0
    %659 = vmatprep.mubr.bf16.mxu0 %v455
    %660 = vmatmul.mubr.bf16.gmra.mxu0 %v399
    %v661 = vpop.f32.mrf.mxu0
    %v662 = vadd.f32 %v505, %v661
    %v663 = vpop.f32.mrf.mxu0
    %v664 = vpop.f32.mrf.mxu0
    %v665 = vadd.f32 %v505, %v664
    %v666 = vpop.f32.mrf.mxu0
    %667 = vmatprep.mubr.bf16.mxu0 %v456
    %668 = vmatmul.mubr.bf16.gmra.mxu0 %v400
    %v669 = vpop.f32.mrf.mxu0
    %v670 = vadd.f32 %v505, %v669
    %v671 = vpop.f32.mrf.mxu0
    %v672 = vpop.f32.mrf.mxu0
    %v673 = vadd.f32 %v505, %v672
    %v674 = vpop.f32.mrf.mxu0
    %675 = vmatprep.mubr.bf16.mxu0 %v457
    %676 = vmatmul.mubr.bf16.gmra.mxu0 %v401
    %v677 = vpop.f32.mrf.mxu0
    %v678 = vadd.f32 %v505, %v677
    %v679 = vpop.f32.mrf.mxu0
    %v680 = vpop.f32.mrf.mxu0
    %v681 = vadd.f32 %v505, %v680
    %v682 = vpop.f32.mrf.mxu0
    %683 = vmatprep.mubr.bf16.mxu0 %v458
    %684 = vmatmul.mubr.bf16.gmra.mxu0 %v402
    %v685 = vpop.f32.mrf.mxu0
    %v686 = vadd.f32 %v505, %v685
    %v687 = vpop.f32.mrf.mxu0
    %v688 = vpop.f32.mrf.mxu0
    %v689 = vadd.f32 %v505, %v688
    %v690 = vpop.f32.mrf.mxu0
    %691 = vmatprep.mubr.bf16.mxu0 %v459
    %692 = vmatmul.mubr.bf16.gmra.mxu0 %v403
    %v693 = vpop.f32.mrf.mxu0
    %v694 = vadd.f32 %v505, %v693
    %v695 = vpop.f32.mrf.mxu0
    %v696 = vpop.f32.mrf.mxu0
    %v697 = vadd.f32 %v505, %v696
    %v698 = vpop.f32.mrf.mxu0
    %699 = vdwg.mxu0
    %700 = vst [vmem:[%s6] sm:$0xff] %v638
    %701 = vst [vmem:[%s6 + $0x8] sm:$0xff] %v641
    %702 = vst [vmem:[%s6 + $0x10] sm:$0xff] %v646
    %703 = vst [vmem:[%s6 + $0x18] sm:$0xff] %v649
    %704 = vst [vmem:[%s6 + $0x20] sm:$0xff] %v654
    %705 = vst [vmem:[%s6 + $0x28] sm:$0xff] %v657
    %706 = vst [vmem:[%s6 + $0x30] sm:$0xff] %v662
    %707 = vst [vmem:[%s6 + $0x38] sm:$0xff] %v665
    %708 = vst [vmem:[%s6 + $0x40] sm:$0xff] %v670
    %709 = vst [vmem:[%s6 + $0x48] sm:$0xff] %v673
    %710 = vst [vmem:[%s6 + $0x50] sm:$0xff] %v678
    %711 = vst [vmem:[%s6 + $0x58] sm:$0xff] %v681
    %712 = vst [vmem:[%s6 + $0x60] sm:$0xff] %v686
    %713 = vst [vmem:[%s6 + $0x68] sm:$0xff] %v689
    %714 = vst [vmem:[%s6 + $0x70] sm:$0xff] %v694
    %715 = vst [vmem:[%s6 + $0x78] sm:$0xff] %v697
  $region33: #{gnn_forward.3} parent=0 // pred_fallthru
    _
  // Predicated region
  $region34: #{gnn_forward.3} parent=0 // pred_check
    _
  $region35: #{gnn_forward.3} parent=0 // pred_check_branch
    %717 = sbr.rel (0) target = $region37
  $region36: #{gnn_forward.3} parent=0 // pred_region
    _
  $region37: #{gnn_forward.3} parent=0 // pred_fallthru
    _
  // Predicated region
  $region38: #{gnn_forward.3} parent=0 // pred_check
    _
  $region39: #{gnn_forward.3} parent=0 // pred_check_branch
    %719 = sbr.rel (0) target = $region41
  $region40: #{gnn_forward.3} parent=0 // pred_region
    _
  $region41: #{gnn_forward.3} parent=0 // pred_fallthru
    _

// kernel: gnn_forward.2
$region0: #{gnn_forward.2}
  #allocation0 [shape = 'u32[]', space=smem, size = 0x4, offset = 0x4, fixed_abs, tag = 'smem constant byte address 0x4 - core index']
  #allocation1 [shape = 'u32[144,128]{1,0:T(1,128)}', space=vmem, size = 0x12000, scoped, tag = 'internal scratch']
  #allocation2 [shape = 'f32[128,128]{1,0:T(8,128)}', space=vmem, size = 0x10000, scoped, tag = 'scratch operand']
  %s0 = inlined_call_operand.vmem [shape: s8[128,128], index: 0, kind: input, shape index: {}]
  %s1 = inlined_call_operand.vmem [shape: bf16[128,128], index: 1, kind: input, shape index: {}, may-alias: {1,2}]
  %s2 = inlined_call_operand.vmem [shape: bf16[128,128], index: 2, kind: input, shape index: {}, may-alias: {1,2}]
  %s3 = inlined_call_operand.vmem [shape: f32[128,1], index: 3, kind: input, shape index: {}]
  %s4 = inlined_call_operand.vmem [shape: bf16[256,128], index: 4, kind: input, shape index: {}]
  %s5 = inlined_call_operand.vmem [shape: f32[1,128], index: 5, kind: input, shape index: {}]
  %s6 = inlined_call_operand.vmem [shape: bf16[128,128], index: 6, kind: output, shape index: {}]
  %s7 = sld [smem:[#allocation0]]
  $region42: #{gnn_forward.2} parent=0
    _
  %s9 = ssub.s32 1, %s7
  %s10 = scalar_select 0, %s9, %s7
  // Predicated region
  $region2: #{gnn_forward.2} parent=0 // pred_check
    _
  $region3: #{gnn_forward.2} parent=0 // pred_check_branch
    %12 = sbr.rel (0) target = $region5
  $region4: #{gnn_forward.2} parent=0 // pred_region
    _
  $region5: #{gnn_forward.2} parent=0 // pred_fallthru
    _
  // Predicated region
  $region6: #{gnn_forward.2} parent=0 // pred_check
    _
  $region7: #{gnn_forward.2} parent=0 // pred_check_branch
    %14 = sbr.rel (0) target = $region9
  $region8: #{gnn_forward.2} parent=0 // pred_region
    _
  $region9: #{gnn_forward.2} parent=0 // pred_fallthru
    _
  // Predicated region
  $region10: #{gnn_forward.2} parent=0 // pred_check
    _
  $region11: #{gnn_forward.2} parent=0 // pred_check_branch
    %16 = sbr.rel (0) target = $region13
  $region12: #{gnn_forward.2} parent=0 // pred_region
    _
  $region13: #{gnn_forward.2} parent=0 // pred_fallthru
    _
  // Predicated region
  $region14: #{gnn_forward.2} parent=0 // pred_check
    _
  $region15: #{gnn_forward.2} parent=0 // pred_check_branch
    %18 = sbr.rel (0) target = $region17
  $region16: #{gnn_forward.2} parent=0 // pred_region
    _
  $region17: #{gnn_forward.2} parent=0 // pred_fallthru
    _
  // Predicated region
  $region18: #{gnn_forward.2} parent=0 // pred_check
    _
  $region19: #{gnn_forward.2} parent=0 // pred_check_branch
    %20 = sbr.rel (0) target = $region21
  $region20: #{gnn_forward.2} parent=0 // pred_region
    _
  $region21: #{gnn_forward.2} parent=0 // pred_fallthru
    _
  // Predicated region
  $region22: #{gnn_forward.2} parent=0 // pred_check
    _
  $region23: #{gnn_forward.2} parent=0 // pred_check_branch
    %22 = sbr.rel (0) target = $region25
  $region24: #{gnn_forward.2} parent=0 // pred_region
    _
  $region25: #{gnn_forward.2} parent=0 // pred_fallthru
    _
  %p24 = scmp.eq.s32.totalorder 0, 0
  // Predicated region
  $region26: #{gnn_forward.2} parent=0 // pred_check
    %p25 = pneg %p24
  $region27: #{gnn_forward.2} parent=0 // pred_check_branch
    %27 = sbr.rel (%p25) target = $region29
  $region28: #{gnn_forward.2} parent=0 // pred_region
    %28 = vst [vmem:[#allocation2] sm:$0xff] 0.0
    %29 = vst [vmem:[#allocation2 + $0x8] sm:$0xff] 0.0
    %30 = vst [vmem:[#allocation2 + $0x10] sm:$0xff] 0.0
    %31 = vst [vmem:[#allocation2 + $0x18] sm:$0xff] 0.0
    %32 = vst [vmem:[#allocation2 + $0x20] sm:$0xff] 0.0
    %33 = vst [vmem:[#allocation2 + $0x28] sm:$0xff] 0.0
    %34 = vst [vmem:[#allocation2 + $0x30] sm:$0xff] 0.0
    %35 = vst [vmem:[#allocation2 + $0x38] sm:$0xff] 0.0
    %36 = vst [vmem:[#allocation2 + $0x40] sm:$0xff] 0.0
    %37 = vst [vmem:[#allocation2 + $0x48] sm:$0xff] 0.0
    %38 = vst [vmem:[#allocation2 + $0x50] sm:$0xff] 0.0
    %39 = vst [vmem:[#allocation2 + $0x58] sm:$0xff] 0.0
    %40 = vst [vmem:[#allocation2 + $0x60] sm:$0xff] 0.0
    %41 = vst [vmem:[#allocation2 + $0x68] sm:$0xff] 0.0
    %42 = vst [vmem:[#allocation2 + $0x70] sm:$0xff] 0.0
    %43 = vst [vmem:[#allocation2 + $0x78] sm:$0xff] 0.0
  $region29: #{gnn_forward.2} parent=0 // pred_fallthru
    _
  %v44 = vld [vmem:[#allocation2] sm:$0xff]
  %v45 = vld [vmem:[#allocation2 + $0x8] sm:$0xff]
  %v46 = vld [vmem:[#allocation2 + $0x10] sm:$0xff]
  %v47 = vld [vmem:[#allocation2 + $0x18] sm:$0xff]
  %v48 = vld [vmem:[#allocation2 + $0x20] sm:$0xff]
  %v49 = vld [vmem:[#allocation2 + $0x28] sm:$0xff]
  %v50 = vld [vmem:[#allocation2 + $0x30] sm:$0xff]
  %v51 = vld [vmem:[#allocation2 + $0x38] sm:$0xff]
  %v52 = vld [vmem:[#allocation2 + $0x40] sm:$0xff]
  %v53 = vld [vmem:[#allocation2 + $0x48] sm:$0xff]
  %v54 = vld [vmem:[#allocation2 + $0x50] sm:$0xff]
  %v55 = vld [vmem:[#allocation2 + $0x58] sm:$0xff]
  %v56 = vld [vmem:[#allocation2 + $0x60] sm:$0xff]
  %v57 = vld [vmem:[#allocation2 + $0x68] sm:$0xff]
  %v58 = vld [vmem:[#allocation2 + $0x70] sm:$0xff]
  %v59 = vld [vmem:[#allocation2 + $0x78] sm:$0xff]
  %v60 = vld [vmem:[%s0] sm:$0xff]
  %v61 = vld [vmem:[%s0 + $0x8] sm:$0xff]
  %v62 = vld [vmem:[%s0 + $0x10] sm:$0xff]
  %v63 = vld [vmem:[%s0 + $0x18] sm:$0xff]
  %v64 = vunpack.c.l.s8.bf16 %v60
  %v65 = vunpack.c.h.s8.bf16 %v60
  %v66 = vunpack.c.l.s8.bf16 %v61
  %v67 = vunpack.c.h.s8.bf16 %v61
  %v68 = vunpack.c.l.s8.bf16 %v62
  %v69 = vunpack.c.h.s8.bf16 %v62
  %v70 = vunpack.c.l.s8.bf16 %v63
  %v71 = vunpack.c.h.s8.bf16 %v63
  %v72 = vld [vmem:[%s1] sm:$0xf]
  %v73 = vld [vmem:[%s1 + $0x4] sm:$0xf]
  %v74 = vld [vmem:[%s1 + $0x8] sm:$0xf]
  %v75 = vld [vmem:[%s1 + $0xc] sm:$0xf]
  %v76 = vld [vmem:[%s1 + $0x10] sm:$0xf]
  %v77 = vld [vmem:[%s1 + $0x14] sm:$0xf]
  %v78 = vld [vmem:[%s1 + $0x18] sm:$0xf]
  %v79 = vld [vmem:[%s1 + $0x1c] sm:$0xf]
  %v80 = vld [vmem:[%s1 + $0x20] sm:$0xf]
  %v81 = vld [vmem:[%s1 + $0x24] sm:$0xf]
  %v82 = vld [vmem:[%s1 + $0x28] sm:$0xf]
  %v83 = vld [vmem:[%s1 + $0x2c] sm:$0xf]
  %v84 = vld [vmem:[%s1 + $0x30] sm:$0xf]
  %v85 = vld [vmem:[%s1 + $0x34] sm:$0xf]
  %v86 = vld [vmem:[%s1 + $0x38] sm:$0xf]
  %v87 = vld [vmem:[%s1 + $0x3c] sm:$0xf]
  %v104 = vunpack.c.l.b16 %v72
  %v105 = vunpack.c.l.b16 %v73
  %v106 = vunpack.c.l.b16 %v74
  %v107 = vunpack.c.l.b16 %v75
  %v108 = vunpack.c.l.b16 %v76
  %v109 = vunpack.c.l.b16 %v77
  %v110 = vunpack.c.l.b16 %v78
  %v111 = vunpack.c.l.b16 %v79
  %v112 = vunpack.c.l.b16 %v80
  %v113 = vunpack.c.l.b16 %v81
  %v114 = vunpack.c.l.b16 %v82
  %v115 = vunpack.c.l.b16 %v83
  %v116 = vunpack.c.l.b16 %v84
  %v117 = vunpack.c.l.b16 %v85
  %v118 = vunpack.c.l.b16 %v86
  %v119 = vunpack.c.l.b16 %v87
  %v120 = vpack.c.b16 %v105, %v104
  %v121 = vpack.c.b16 %v107, %v106
  %v122 = vpack.c.b16 %v109, %v108
  %v123 = vpack.c.b16 %v111, %v110
  %v124 = vpack.c.b16 %v113, %v112
  %v125 = vpack.c.b16 %v115, %v114
  %v126 = vpack.c.b16 %v117, %v116
  %v127 = vpack.c.b16 %v119, %v118
  %136 = vmatprep.subr.bf16.mxu0 0
  %137 = vmatpush1.bf16.msra.mxu0 %v127
  %138 = vmatprep.subr.bf16.mxu0 0
  %139 = vmatpush1.bf16.msra.mxu0 %v126
  %140 = vmatprep.subr.bf16.mxu0 0
  %141 = vmatpush1.bf16.msra.mxu0 %v125
  %142 = vmatprep.subr.bf16.mxu0 0
  %143 = vmatpush1.bf16.msra.mxu0 %v124
  %144 = vmatprep.subr.bf16.mxu0 0
  %145 = vmatpush1.bf16.msra.mxu0 %v123
  %146 = vmatprep.subr.bf16.mxu0 0
  %147 = vmatpush1.bf16.msra.mxu0 %v122
  %148 = vmatprep.subr.bf16.mxu0 0
  %149 = vmatpush1.bf16.msra.mxu0 %v121
  %150 = vmatprep.subr.bf16.mxu0 0
  %151 = vmatpush1.bf16.msra.mxu0 %v120
  %152 = vmatprep.subr.bf16.mxu0 0
  %153 = vmatpush2.bf16.msra.mxu0 0
  %154 = vmatprep.subr.bf16.mxu0 0
  %155 = vmatpush2.bf16.msra.mxu0 0
  %156 = vmatprep.subr.bf16.mxu0 0
  %157 = vmatpush2.bf16.msra.mxu0 0
  %158 = vmatprep.subr.bf16.mxu0 0
  %159 = vmatpush2.bf16.msra.mxu0 0
  %160 = vmatprep.subr.bf16.mxu0 0
  %161 = vmatpush2.bf16.msra.mxu0 0
  %162 = vmatprep.subr.bf16.mxu0 0
  %163 = vmatpush2.bf16.msra.mxu0 0
  %164 = vmatprep.subr.bf16.mxu0 0
  %165 = vmatpush2.bf16.msra.mxu0 0
  %166 = vmatprep.subr.bf16.mxu0 0
  %167 = vmatpush2.bf16.msra.mxu0 0
  %168 = vmatprep.mubr.bf16.mxu0 0
  %169 = vmatmul.mubr.bf16.gmra.mxu0 %v64
  %v170 = vpop.f32.mrf.mxu0
  %v171 = vadd.f32 0.0, %v170
  %v172 = vpop.f32.mrf.mxu0
  %v173 = vpop.f32.mrf.mxu0
  %v174 = vadd.f32 0.0, %v173
  %v175 = vpop.f32.mrf.mxu0
  %176 = vmatprep.mubr.bf16.mxu0 0
  %177 = vmatmul.mubr.bf16.gmra.mxu0 %v65
  %v178 = vpop.f32.mrf.mxu0
  %v179 = vadd.f32 0.0, %v178
  %v180 = vpop.f32.mrf.mxu0
  %v181 = vpop.f32.mrf.mxu0
  %v182 = vadd.f32 0.0, %v181
  %v183 = vpop.f32.mrf.mxu0
  %184 = vmatprep.mubr.bf16.mxu0 0
  %185 = vmatmul.mubr.bf16.gmra.mxu0 %v66
  %v186 = vpop.f32.mrf.mxu0
  %v187 = vadd.f32 0.0, %v186
  %v188 = vpop.f32.mrf.mxu0
  %v189 = vpop.f32.mrf.mxu0
  %v190 = vadd.f32 0.0, %v189
  %v191 = vpop.f32.mrf.mxu0
  %192 = vmatprep.mubr.bf16.mxu0 0
  %193 = vmatmul.mubr.bf16.gmra.mxu0 %v67
  %v194 = vpop.f32.mrf.mxu0
  %v195 = vadd.f32 0.0, %v194
  %v196 = vpop.f32.mrf.mxu0
  %v197 = vpop.f32.mrf.mxu0
  %v198 = vadd.f32 0.0, %v197
  %v199 = vpop.f32.mrf.mxu0
  %200 = vmatprep.mubr.bf16.mxu0 0
  %201 = vmatmul.mubr.bf16.gmra.mxu0 %v68
  %v202 = vpop.f32.mrf.mxu0
  %v203 = vadd.f32 0.0, %v202
  %v204 = vpop.f32.mrf.mxu0
  %v205 = vpop.f32.mrf.mxu0
  %v206 = vadd.f32 0.0, %v205
  %v207 = vpop.f32.mrf.mxu0
  %208 = vmatprep.mubr.bf16.mxu0 0
  %209 = vmatmul.mubr.bf16.gmra.mxu0 %v69
  %v210 = vpop.f32.mrf.mxu0
  %v211 = vadd.f32 0.0, %v210
  %v212 = vpop.f32.mrf.mxu0
  %v213 = vpop.f32.mrf.mxu0
  %v214 = vadd.f32 0.0, %v213
  %v215 = vpop.f32.mrf.mxu0
  %216 = vmatprep.mubr.bf16.mxu0 0
  %217 = vmatmul.mubr.bf16.gmra.mxu0 %v70
  %v218 = vpop.f32.mrf.mxu0
  %v219 = vadd.f32 0.0, %v218
  %v220 = vpop.f32.mrf.mxu0
  %v221 = vpop.f32.mrf.mxu0
  %v222 = vadd.f32 0.0, %v221
  %v223 = vpop.f32.mrf.mxu0
  %224 = vmatprep.mubr.bf16.mxu0 0
  %225 = vmatmul.mubr.bf16.gmra.mxu0 %v71
  %v226 = vpop.f32.mrf.mxu0
  %v227 = vadd.f32 0.0, %v226
  %v228 = vpop.f32.mrf.mxu0
  %v229 = vpop.f32.mrf.mxu0
  %v230 = vadd.f32 0.0, %v229
  %v231 = vpop.f32.mrf.mxu0
  %232 = vdwg.mxu0
  %v233 = vadd.f32 %v44, %v171
  %v234 = vadd.f32 %v45, %v174
  %v235 = vadd.f32 %v46, %v179
  %v236 = vadd.f32 %v47, %v182
  %v237 = vadd.f32 %v48, %v187
  %v238 = vadd.f32 %v49, %v190
  %v239 = vadd.f32 %v50, %v195
  %v240 = vadd.f32 %v51, %v198
  %v241 = vadd.f32 %v52, %v203
  %v242 = vadd.f32 %v53, %v206
  %v243 = vadd.f32 %v54, %v211
  %v244 = vadd.f32 %v55, %v214
  %v245 = vadd.f32 %v56, %v219
  %v246 = vadd.f32 %v57, %v222
  %v247 = vadd.f32 %v58, %v227
  %v248 = vadd.f32 %v59, %v230
  %249 = vst [vmem:[#allocation2] sm:$0xff] %v233
  %250 = vst [vmem:[#allocation2 + $0x8] sm:$0xff] %v234
  %251 = vst [vmem:[#allocation2 + $0x10] sm:$0xff] %v235
  %252 = vst [vmem:[#allocation2 + $0x18] sm:$0xff] %v236
  %253 = vst [vmem:[#allocation2 + $0x20] sm:$0xff] %v237
  %254 = vst [vmem:[#allocation2 + $0x28] sm:$0xff] %v238
  %255 = vst [vmem:[#allocation2 + $0x30] sm:$0xff] %v239
  %256 = vst [vmem:[#allocation2 + $0x38] sm:$0xff] %v240
  %257 = vst [vmem:[#allocation2 + $0x40] sm:$0xff] %v241
  %258 = vst [vmem:[#allocation2 + $0x48] sm:$0xff] %v242
  %259 = vst [vmem:[#allocation2 + $0x50] sm:$0xff] %v243
  %260 = vst [vmem:[#allocation2 + $0x58] sm:$0xff] %v244
  %261 = vst [vmem:[#allocation2 + $0x60] sm:$0xff] %v245
  %262 = vst [vmem:[#allocation2 + $0x68] sm:$0xff] %v246
  %263 = vst [vmem:[#allocation2 + $0x70] sm:$0xff] %v247
  %264 = vst [vmem:[#allocation2 + $0x78] sm:$0xff] %v248
  // Predicated region
  $region30: #{gnn_forward.2} parent=0 // pred_check
    %p265 = pneg %p24
  $region31: #{gnn_forward.2} parent=0 // pred_check_branch
    %267 = sbr.rel (%p265) target = $region33
  $region32: #{gnn_forward.2} parent=0 // pred_region
    %v268 = vld [vmem:[#allocation2] sm:$0xff]
    %v269 = vld [vmem:[#allocation2 + $0x8] sm:$0xff]
    %v270 = vld [vmem:[#allocation2 + $0x10] sm:$0xff]
    %v271 = vld [vmem:[#allocation2 + $0x18] sm:$0xff]
    %v272 = vld [vmem:[#allocation2 + $0x20] sm:$0xff]
    %v273 = vld [vmem:[#allocation2 + $0x28] sm:$0xff]
    %v274 = vld [vmem:[#allocation2 + $0x30] sm:$0xff]
    %v275 = vld [vmem:[#allocation2 + $0x38] sm:$0xff]
    %v276 = vld [vmem:[#allocation2 + $0x40] sm:$0xff]
    %v277 = vld [vmem:[#allocation2 + $0x48] sm:$0xff]
    %v278 = vld [vmem:[#allocation2 + $0x50] sm:$0xff]
    %v279 = vld [vmem:[#allocation2 + $0x58] sm:$0xff]
    %v280 = vld [vmem:[#allocation2 + $0x60] sm:$0xff]
    %v281 = vld [vmem:[#allocation2 + $0x68] sm:$0xff]
    %v282 = vld [vmem:[#allocation2 + $0x70] sm:$0xff]
    %v283 = vld [vmem:[#allocation2 + $0x78] sm:$0xff]
    %v284 = vld [vmem:[%s3] sm:$0xff]
    %v285 = vld [vmem:[%s3 + $0x8] sm:$0xff]
    %v286 = vld [vmem:[%s3 + $0x10] sm:$0xff]
    %v287 = vld [vmem:[%s3 + $0x18] sm:$0xff]
    %v288 = vld [vmem:[%s3 + $0x20] sm:$0xff]
    %v289 = vld [vmem:[%s3 + $0x28] sm:$0xff]
    %v290 = vld [vmem:[%s3 + $0x30] sm:$0xff]
    %v291 = vld [vmem:[%s3 + $0x38] sm:$0xff]
    %v292 = vld [vmem:[%s3 + $0x40] sm:$0xff]
    %v293 = vld [vmem:[%s3 + $0x48] sm:$0xff]
    %v294 = vld [vmem:[%s3 + $0x50] sm:$0xff]
    %v295 = vld [vmem:[%s3 + $0x58] sm:$0xff]
    %v296 = vld [vmem:[%s3 + $0x60] sm:$0xff]
    %v297 = vld [vmem:[%s3 + $0x68] sm:$0xff]
    %v298 = vld [vmem:[%s3 + $0x70] sm:$0xff]
    %v299 = vld [vmem:[%s3 + $0x78] sm:$0xff]
    %301 = vset.pattern.permute.xlu0 0
    %302 = vperm.xlu0 %301, %v284
    %v303 = vpop.permute.xlu0 %302
    %306 = vset.pattern.permute.xlu0 0
    %307 = vperm.xlu0 %306, %v285
    %v308 = vpop.permute.xlu0 %307
    %311 = vset.pattern.permute.xlu0 0
    %312 = vperm.xlu0 %311, %v286
    %v313 = vpop.permute.xlu0 %312
    %316 = vset.pattern.permute.xlu0 0
    %317 = vperm.xlu0 %316, %v287
    %v318 = vpop.permute.xlu0 %317
    %321 = vset.pattern.permute.xlu0 0
    %322 = vperm.xlu0 %321, %v288
    %v323 = vpop.permute.xlu0 %322
    %326 = vset.pattern.permute.xlu0 0
    %327 = vperm.xlu0 %326, %v289
    %v328 = vpop.permute.xlu0 %327
    %331 = vset.pattern.permute.xlu0 0
    %332 = vperm.xlu0 %331, %v290
    %v333 = vpop.permute.xlu0 %332
    %336 = vset.pattern.permute.xlu0 0
    %337 = vperm.xlu0 %336, %v291
    %v338 = vpop.permute.xlu0 %337
    %341 = vset.pattern.permute.xlu0 0
    %342 = vperm.xlu0 %341, %v292
    %v343 = vpop.permute.xlu0 %342
    %346 = vset.pattern.permute.xlu0 0
    %347 = vperm.xlu0 %346, %v293
    %v348 = vpop.permute.xlu0 %347
    %351 = vset.pattern.permute.xlu0 0
    %352 = vperm.xlu0 %351, %v294
    %v353 = vpop.permute.xlu0 %352
    %356 = vset.pattern.permute.xlu0 0
    %357 = vperm.xlu0 %356, %v295
    %v358 = vpop.permute.xlu0 %357
    %361 = vset.pattern.permute.xlu0 0
    %362 = vperm.xlu0 %361, %v296
    %v363 = vpop.permute.xlu0 %362
    %366 = vset.pattern.permute.xlu0 0
    %367 = vperm.xlu0 %366, %v297
    %v368 = vpop.permute.xlu0 %367
    %371 = vset.pattern.permute.xlu0 0
    %372 = vperm.xlu0 %371, %v298
    %v373 = vpop.permute.xlu0 %372
    %376 = vset.pattern.permute.xlu0 0
    %377 = vperm.xlu0 %376, %v299
    %v378 = vpop.permute.xlu0 %377
    %v380 = vmul.f32 %v268, %v303
    %v381 = vmul.f32 %v269, %v308
    %v382 = vmul.f32 %v270, %v313
    %v383 = vmul.f32 %v271, %v318
    %v384 = vmul.f32 %v272, %v323
    %v385 = vmul.f32 %v273, %v328
    %v386 = vmul.f32 %v274, %v333
    %v387 = vmul.f32 %v275, %v338
    %v388 = vmul.f32 %v276, %v343
    %v389 = vmul.f32 %v277, %v348
    %v390 = vmul.f32 %v278, %v353
    %v391 = vmul.f32 %v279, %v358
    %v392 = vmul.f32 %v280, %v363
    %v393 = vmul.f32 %v281, %v368
    %v394 = vmul.f32 %v282, %v373
    %v395 = vmul.f32 %v283, %v378
    %v396 = vpack.c.bf16 %v381, %v380
    %v397 = vpack.c.bf16 %v383, %v382
    %v398 = vpack.c.bf16 %v385, %v384
    %v399 = vpack.c.bf16 %v387, %v386
    %v400 = vpack.c.bf16 %v389, %v388
    %v401 = vpack.c.bf16 %v391, %v390
    %v402 = vpack.c.bf16 %v393, %v392
    %v403 = vpack.c.bf16 %v395, %v394
    %v404 = vld [vmem:[%s2] sm:$0xf]
    %v405 = vld [vmem:[%s2 + $0x4] sm:$0xf]
    %v406 = vld [vmem:[%s2 + $0x8] sm:$0xf]
    %v407 = vld [vmem:[%s2 + $0xc] sm:$0xf]
    %v408 = vld [vmem:[%s2 + $0x10] sm:$0xf]
    %v409 = vld [vmem:[%s2 + $0x14] sm:$0xf]
    %v410 = vld [vmem:[%s2 + $0x18] sm:$0xf]
    %v411 = vld [vmem:[%s2 + $0x1c] sm:$0xf]
    %v412 = vld [vmem:[%s2 + $0x20] sm:$0xf]
    %v413 = vld [vmem:[%s2 + $0x24] sm:$0xf]
    %v414 = vld [vmem:[%s2 + $0x28] sm:$0xf]
    %v415 = vld [vmem:[%s2 + $0x2c] sm:$0xf]
    %v416 = vld [vmem:[%s2 + $0x30] sm:$0xf]
    %v417 = vld [vmem:[%s2 + $0x34] sm:$0xf]
    %v418 = vld [vmem:[%s2 + $0x38] sm:$0xf]
    %v419 = vld [vmem:[%s2 + $0x3c] sm:$0xf]
    %v436 = vunpack.c.l.b16 %v404
    %v437 = vunpack.c.l.b16 %v405
    %v438 = vunpack.c.l.b16 %v406
    %v439 = vunpack.c.l.b16 %v407
    %v440 = vunpack.c.l.b16 %v408
    %v441 = vunpack.c.l.b16 %v409
    %v442 = vunpack.c.l.b16 %v410
    %v443 = vunpack.c.l.b16 %v411
    %v444 = vunpack.c.l.b16 %v412
    %v445 = vunpack.c.l.b16 %v413
    %v446 = vunpack.c.l.b16 %v414
    %v447 = vunpack.c.l.b16 %v415
    %v448 = vunpack.c.l.b16 %v416
    %v449 = vunpack.c.l.b16 %v417
    %v450 = vunpack.c.l.b16 %v418
    %v451 = vunpack.c.l.b16 %v419
    %v452 = vpack.c.b16 %v437, %v436
    %v453 = vpack.c.b16 %v439, %v438
    %v454 = vpack.c.b16 %v441, %v440
    %v455 = vpack.c.b16 %v443, %v442
    %v456 = vpack.c.b16 %v445, %v444
    %v457 = vpack.c.b16 %v447, %v446
    %v458 = vpack.c.b16 %v449, %v448
    %v459 = vpack.c.b16 %v451, %v450
    %v468 = vld [vmem:[%s4] sm:$0xf]
    %v469 = vld [vmem:[%s4 + $0x4] sm:$0xf]
    %v470 = vld [vmem:[%s4 + $0x8] sm:$0xf]
    %v471 = vld [vmem:[%s4 + $0xc] sm:$0xf]
    %v472 = vld [vmem:[%s4 + $0x10] sm:$0xf]
    %v473 = vld [vmem:[%s4 + $0x14] sm:$0xf]
    %v474 = vld [vmem:[%s4 + $0x18] sm:$0xf]
    %v475 = vld [vmem:[%s4 + $0x1c] sm:$0xf]
    %v476 = vld [vmem:[%s4 + $0x20] sm:$0xf]
    %v477 = vld [vmem:[%s4 + $0x24] sm:$0xf]
    %v478 = vld [vmem:[%s4 + $0x28] sm:$0xf]
    %v479 = vld [vmem:[%s4 + $0x2c] sm:$0xf]
    %v480 = vld [vmem:[%s4 + $0x30] sm:$0xf]
    %v481 = vld [vmem:[%s4 + $0x34] sm:$0xf]
    %v482 = vld [vmem:[%s4 + $0x38] sm:$0xf]
    %v483 = vld [vmem:[%s4 + $0x3c] sm:$0xf]
    %v484 = vld [vmem:[%s4 + $0x40] sm:$0xf]
    %v485 = vld [vmem:[%s4 + $0x44] sm:$0xf]
    %v486 = vld [vmem:[%s4 + $0x48] sm:$0xf]
    %v487 = vld [vmem:[%s4 + $0x4c] sm:$0xf]
    %v488 = vld [vmem:[%s4 + $0x50] sm:$0xf]
    %v489 = vld [vmem:[%s4 + $0x54] sm:$0xf]
    %v490 = vld [vmem:[%s4 + $0x58] sm:$0xf]
    %v491 = vld [vmem:[%s4 + $0x5c] sm:$0xf]
    %v492 = vld [vmem:[%s4 + $0x60] sm:$0xf]
    %v493 = vld [vmem:[%s4 + $0x64] sm:$0xf]
    %v494 = vld [vmem:[%s4 + $0x68] sm:$0xf]
    %v495 = vld [vmem:[%s4 + $0x6c] sm:$0xf]
    %v496 = vld [vmem:[%s4 + $0x70] sm:$0xf]
    %v497 = vld [vmem:[%s4 + $0x74] sm:$0xf]
    %v498 = vld [vmem:[%s4 + $0x78] sm:$0xf]
    %v499 = vld [vmem:[%s4 + $0x7c] sm:$0xf]
    %v500 = vld [vmem:[%s5] sm:$0x1]
    %v502 = vlaneseq
    %v503 = vshrl.u32 %v502, 7
    %v504 = vsub.s32 0, %v503
    %v505 = vrot.slane %v500, %v504
    %v539 = vunpack.c.l.b16 %v468
    %v540 = vunpack.c.l.b16 %v469
    %v541 = vunpack.c.l.b16 %v470
    %v542 = vunpack.c.l.b16 %v471
    %v543 = vunpack.c.l.b16 %v472
    %v544 = vunpack.c.l.b16 %v473
    %v545 = vunpack.c.l.b16 %v474
    %v546 = vunpack.c.l.b16 %v475
    %v547 = vunpack.c.l.b16 %v476
    %v548 = vunpack.c.l.b16 %v477
    %v549 = vunpack.c.l.b16 %v478
    %v550 = vunpack.c.l.b16 %v479
    %v551 = vunpack.c.l.b16 %v480
    %v552 = vunpack.c.l.b16 %v481
    %v553 = vunpack.c.l.b16 %v482
    %v554 = vunpack.c.l.b16 %v483
    %v555 = vunpack.c.l.b16 %v484
    %v556 = vunpack.c.l.b16 %v485
    %v557 = vunpack.c.l.b16 %v486
    %v558 = vunpack.c.l.b16 %v487
    %v559 = vunpack.c.l.b16 %v488
    %v560 = vunpack.c.l.b16 %v489
    %v561 = vunpack.c.l.b16 %v490
    %v562 = vunpack.c.l.b16 %v491
    %v563 = vunpack.c.l.b16 %v492
    %v564 = vunpack.c.l.b16 %v493
    %v565 = vunpack.c.l.b16 %v494
    %v566 = vunpack.c.l.b16 %v495
    %v567 = vunpack.c.l.b16 %v496
    %v568 = vunpack.c.l.b16 %v497
    %v569 = vunpack.c.l.b16 %v498
    %v570 = vunpack.c.l.b16 %v499
    %v571 = vpack.c.b16 %v540, %v539
    %v572 = vpack.c.b16 %v542, %v541
    %v573 = vpack.c.b16 %v544, %v543
    %v574 = vpack.c.b16 %v546, %v545
    %v575 = vpack.c.b16 %v548, %v547
    %v576 = vpack.c.b16 %v550, %v549
    %v577 = vpack.c.b16 %v552, %v551
    %v578 = vpack.c.b16 %v554, %v553
    %v579 = vpack.c.b16 %v556, %v555
    %v580 = vpack.c.b16 %v558, %v557
    %v581 = vpack.c.b16 %v560, %v559
    %v582 = vpack.c.b16 %v562, %v561
    %v583 = vpack.c.b16 %v564, %v563
    %v584 = vpack.c.b16 %v566, %v565
    %v585 = vpack.c.b16 %v568, %v567
    %v586 = vpack.c.b16 %v570, %v569
    %603 = vmatprep.subr.bf16.mxu0 0
    %604 = vmatpush1.bf16.msra.mxu0 %v578
    %605 = vmatprep.subr.bf16.mxu0 0
    %606 = vmatpush1.bf16.msra.mxu0 %v577
    %607 = vmatprep.subr.bf16.mxu0 0
    %608 = vmatpush1.bf16.msra.mxu0 %v576
    %609 = vmatprep.subr.bf16.mxu0 0
    %610 = vmatpush1.bf16.msra.mxu0 %v575
    %611 = vmatprep.subr.bf16.mxu0 0
    %612 = vmatpush1.bf16.msra.mxu0 %v574
    %613 = vmatprep.subr.bf16.mxu0 0
    %614 = vmatpush1.bf16.msra.mxu0 %v573
    %615 = vmatprep.subr.bf16.mxu0 0
    %616 = vmatpush1.bf16.msra.mxu0 %v572
    %617 = vmatprep.subr.bf16.mxu0 0
    %618 = vmatpush1.bf16.msra.mxu0 %v571
    %619 = vmatprep.subr.bf16.mxu0 0
    %620 = vmatpush2.bf16.msra.mxu0 %v586
    %621 = vmatprep.subr.bf16.mxu0 0
    %622 = vmatpush2.bf16.msra.mxu0 %v585
    %623 = vmatprep.subr.bf16.mxu0 0
    %624 = vmatpush2.bf16.msra.mxu0 %v584
    %625 = vmatprep.subr.bf16.mxu0 0
    %626 = vmatpush2.bf16.msra.mxu0 %v583
    %627 = vmatprep.subr.bf16.mxu0 0
    %628 = vmatpush2.bf16.msra.mxu0 %v582
    %629 = vmatprep.subr.bf16.mxu0 0
    %630 = vmatpush2.bf16.msra.mxu0 %v581
    %631 = vmatprep.subr.bf16.mxu0 0
    %632 = vmatpush2.bf16.msra.mxu0 %v580
    %633 = vmatprep.subr.bf16.mxu0 0
    %634 = vmatpush2.bf16.msra.mxu0 %v579
    %635 = vmatprep.mubr.bf16.mxu0 %v452
    %636 = vmatmul.mubr.bf16.gmra.mxu0 %v396
    %v637 = vpop.f32.mrf.mxu0
    %v638 = vadd.f32 %v505, %v637
    %v639 = vpop.f32.mrf.mxu0
    %v640 = vpop.f32.mrf.mxu0
    %v641 = vadd.f32 %v505, %v640
    %v642 = vpop.f32.mrf.mxu0
    %643 = vmatprep.mubr.bf16.mxu0 %v453
    %644 = vmatmul.mubr.bf16.gmra.mxu0 %v397
    %v645 = vpop.f32.mrf.mxu0
    %v646 = vadd.f32 %v505, %v645
    %v647 = vpop.f32.mrf.mxu0
    %v648 = vpop.f32.mrf.mxu0
    %v649 = vadd.f32 %v505, %v648
    %v650 = vpop.f32.mrf.mxu0
    %651 = vmatprep.mubr.bf16.mxu0 %v454
    %652 = vmatmul.mubr.bf16.gmra.mxu0 %v398
    %v653 = vpop.f32.mrf.mxu0
    %v654 = vadd.f32 %v505, %v653
    %v655 = vpop.f32.mrf.mxu0
    %v656 = vpop.f32.mrf.mxu0
    %v657 = vadd.f32 %v505, %v656
    %v658 = vpop.f32.mrf.mxu0
    %659 = vmatprep.mubr.bf16.mxu0 %v455
    %660 = vmatmul.mubr.bf16.gmra.mxu0 %v399
    %v661 = vpop.f32.mrf.mxu0
    %v662 = vadd.f32 %v505, %v661
    %v663 = vpop.f32.mrf.mxu0
    %v664 = vpop.f32.mrf.mxu0
    %v665 = vadd.f32 %v505, %v664
    %v666 = vpop.f32.mrf.mxu0
    %667 = vmatprep.mubr.bf16.mxu0 %v456
    %668 = vmatmul.mubr.bf16.gmra.mxu0 %v400
    %v669 = vpop.f32.mrf.mxu0
    %v670 = vadd.f32 %v505, %v669
    %v671 = vpop.f32.mrf.mxu0
    %v672 = vpop.f32.mrf.mxu0
    %v673 = vadd.f32 %v505, %v672
    %v674 = vpop.f32.mrf.mxu0
    %675 = vmatprep.mubr.bf16.mxu0 %v457
    %676 = vmatmul.mubr.bf16.gmra.mxu0 %v401
    %v677 = vpop.f32.mrf.mxu0
    %v678 = vadd.f32 %v505, %v677
    %v679 = vpop.f32.mrf.mxu0
    %v680 = vpop.f32.mrf.mxu0
    %v681 = vadd.f32 %v505, %v680
    %v682 = vpop.f32.mrf.mxu0
    %683 = vmatprep.mubr.bf16.mxu0 %v458
    %684 = vmatmul.mubr.bf16.gmra.mxu0 %v402
    %v685 = vpop.f32.mrf.mxu0
    %v686 = vadd.f32 %v505, %v685
    %v687 = vpop.f32.mrf.mxu0
    %v688 = vpop.f32.mrf.mxu0
    %v689 = vadd.f32 %v505, %v688
    %v690 = vpop.f32.mrf.mxu0
    %691 = vmatprep.mubr.bf16.mxu0 %v459
    %692 = vmatmul.mubr.bf16.gmra.mxu0 %v403
    %v693 = vpop.f32.mrf.mxu0
    %v694 = vadd.f32 %v505, %v693
    %v695 = vpop.f32.mrf.mxu0
    %v696 = vpop.f32.mrf.mxu0
    %v697 = vadd.f32 %v505, %v696
    %v698 = vpop.f32.mrf.mxu0
    %699 = vdwg.mxu0
    %v700 = vmax.f32 %v638, 0.0
    %v701 = vmax.f32 %v641, 0.0
    %v702 = vmax.f32 %v646, 0.0
    %v703 = vmax.f32 %v649, 0.0
    %v704 = vmax.f32 %v654, 0.0
    %v705 = vmax.f32 %v657, 0.0
    %v706 = vmax.f32 %v662, 0.0
    %v707 = vmax.f32 %v665, 0.0
    %v708 = vmax.f32 %v670, 0.0
    %v709 = vmax.f32 %v673, 0.0
    %v710 = vmax.f32 %v678, 0.0
    %v711 = vmax.f32 %v681, 0.0
    %v712 = vmax.f32 %v686, 0.0
    %v713 = vmax.f32 %v689, 0.0
    %v714 = vmax.f32 %v694, 0.0
    %v715 = vmax.f32 %v697, 0.0
    %v716 = vpack.c.bf16 %v701, %v700
    %v717 = vpack.c.bf16 %v703, %v702
    %v718 = vpack.c.bf16 %v705, %v704
    %v719 = vpack.c.bf16 %v707, %v706
    %v720 = vpack.c.bf16 %v709, %v708
    %v721 = vpack.c.bf16 %v711, %v710
    %v722 = vpack.c.bf16 %v713, %v712
    %v723 = vpack.c.bf16 %v715, %v714
    %v732 = vunpack.c.l.b16 %v716
    %v733 = vunpack.c.h.b16 %v716
    %v734 = vunpack.c.l.b16 %v717
    %v735 = vunpack.c.h.b16 %v717
    %v736 = vunpack.c.l.b16 %v718
    %v737 = vunpack.c.h.b16 %v718
    %v738 = vunpack.c.l.b16 %v719
    %v739 = vunpack.c.h.b16 %v719
    %v740 = vunpack.c.l.b16 %v720
    %v741 = vunpack.c.h.b16 %v720
    %v742 = vunpack.c.l.b16 %v721
    %v743 = vunpack.c.h.b16 %v721
    %v744 = vunpack.c.l.b16 %v722
    %v745 = vunpack.c.h.b16 %v722
    %v746 = vunpack.c.l.b16 %v723
    %v747 = vunpack.c.h.b16 %v723
    %v748 = vpack.c.b16 %v732, %v732
    %v749 = vpack.c.b16 %v733, %v733
    %v750 = vpack.c.b16 %v734, %v734
    %v751 = vpack.c.b16 %v735, %v735
    %v752 = vpack.c.b16 %v736, %v736
    %v753 = vpack.c.b16 %v737, %v737
    %v754 = vpack.c.b16 %v738, %v738
    %v755 = vpack.c.b16 %v739, %v739
    %v756 = vpack.c.b16 %v740, %v740
    %v757 = vpack.c.b16 %v741, %v741
    %v758 = vpack.c.b16 %v742, %v742
    %v759 = vpack.c.b16 %v743, %v743
    %v760 = vpack.c.b16 %v744, %v744
    %v761 = vpack.c.b16 %v745, %v745
    %v762 = vpack.c.b16 %v746, %v746
    %v763 = vpack.c.b16 %v747, %v747
    %780 = vst [vmem:[%s6] sm:$0xf] %v748
    %781 = vst [vmem:[%s6 + $0x4] sm:$0xf] %v749
    %782 = vst [vmem:[%s6 + $0x8] sm:$0xf] %v750
    %783 = vst [vmem:[%s6 + $0xc] sm:$0xf] %v751
    %784 = vst [vmem:[%s6 + $0x10] sm:$0xf] %v752
    %785 = vst [vmem:[%s6 + $0x14] sm:$0xf] %v753
    %786 = vst [vmem:[%s6 + $0x18] sm:$0xf] %v754
    %787 = vst [vmem:[%s6 + $0x1c] sm:$0xf] %v755
    %788 = vst [vmem:[%s6 + $0x20] sm:$0xf] %v756
    %789 = vst [vmem:[%s6 + $0x24] sm:$0xf] %v757
    %790 = vst [vmem:[%s6 + $0x28] sm:$0xf] %v758
    %791 = vst [vmem:[%s6 + $0x2c] sm:$0xf] %v759
    %792 = vst [vmem:[%s6 + $0x30] sm:$0xf] %v760
    %793 = vst [vmem:[%s6 + $0x34] sm:$0xf] %v761
    %794 = vst [vmem:[%s6 + $0x38] sm:$0xf] %v762
    %795 = vst [vmem:[%s6 + $0x3c] sm:$0xf] %v763
  $region33: #{gnn_forward.2} parent=0 // pred_fallthru
    _
  // Predicated region
  $region34: #{gnn_forward.2} parent=0 // pred_check
    _
  $region35: #{gnn_forward.2} parent=0 // pred_check_branch
    %797 = sbr.rel (0) target = $region37
  $region36: #{gnn_forward.2} parent=0 // pred_region
    _
  $region37: #{gnn_forward.2} parent=0 // pred_fallthru
    _
  // Predicated region
  $region38: #{gnn_forward.2} parent=0 // pred_check
    _
  $region39: #{gnn_forward.2} parent=0 // pred_check_branch
    %799 = sbr.rel (0) target = $region41
  $region40: #{gnn_forward.2} parent=0 // pred_region
    _
  $region41: #{gnn_forward.2} parent=0 // pred_fallthru
    _

</llo_original>
